<compile_context>
chip_gen: v7x
topology: tpu7x:2x2x1
jax: 0.10.0
libtpu: 0.0.40
codegen_flags: <defaults>
</compile_context>

<pallas_src>
import functools

import numpy as np
import jax
import jax.numpy as jnp
from jax.experimental import pallas as pl
from jax.experimental.pallas import tpu as pltpu

# ------------------------- config (small, ChatGLM-like) ----------------------
VOCAB = 128            # padded_vocab_size
HIDDEN = 32            # hidden_size
NUM_HEADS = 4          # num_attention_heads
HEAD_DIM = HIDDEN // NUM_HEADS          # kv_channels
NUM_KV_HEADS = 2       # multi_query_group_num (multi_query_attention=True)
FFN = 64               # ffn_hidden_size
NUM_LAYERS = 2
EPS = 1e-5             # layernorm_epsilon
ROPE_BASE = 10000.0    # 10000 * rope_ratio (rope_ratio=1.0)
ROTARY_DIM = HEAD_DIM // 2
SEQ = 8                # number of tokens

Q_SIZE = NUM_HEADS * HEAD_DIM
KV_SIZE = NUM_KV_HEADS * HEAD_DIM
QKV_SIZE = Q_SIZE + 2 * KV_SIZE
GQA_GROUP = NUM_HEADS // NUM_KV_HEADS
SCALING = HEAD_DIM ** -0.5

DTYPE = jnp.float32


# ------------------------------ helpers --------------------------------------
def _full_spec(shape):
    zeros = (0,) * len(shape)
    return pl.BlockSpec(shape, lambda i, _z=zeros: _z)


def _rmsnorm(x, w, eps):
    var = jnp.mean(x * x, axis=-1, keepdims=True)
    return x * jax.lax.rsqrt(var + eps) * w


# ------------------------------ fused layer kernel ----------------------------
def _glm_block_kernel(x_ref, cos_q_ref, sin_q_ref, cos_k_ref, sin_k_ref,
                      perm_q_ref, perm_k_ref,
                      in_ln_ref, post_ln_ref,
                      qkv_w_ref, qkv_b_ref, dense_w_ref,
                      gate_w_ref, up_w_ref, down_w_ref,
                      o_ref, *, eps, scaling):
    f32 = jnp.float32
    x = x_ref[...].astype(f32)                                   # [T, H]
    T = x.shape[0]

    # ---- input RMSNorm
    ln1 = _rmsnorm(x, in_ln_ref[...].astype(f32), eps)

    # ---- fused QKV projection + bias (weights pre-transposed to [H, QKV_SIZE])
    qkv = jnp.dot(ln1, qkv_w_ref[...], preferred_element_type=f32) + qkv_b_ref[...]
    q = qkv[:, :Q_SIZE]
    k = qkv[:, Q_SIZE:Q_SIZE + KV_SIZE]
    v = qkv[:, Q_SIZE + KV_SIZE:]

    # ---- rotary (non-neox interleaved, rotary_dim = head_dim // 2), in-kernel:
    #      out = x * COS + (x @ P_swap) * SIN_signed
    q = (q * cos_q_ref[...]
         + jnp.dot(q, perm_q_ref[...], preferred_element_type=f32) * sin_q_ref[...])
    k = (k * cos_k_ref[...]
         + jnp.dot(k, perm_k_ref[...], preferred_element_type=f32) * sin_k_ref[...])

    # fold attention scaling into q once
    q = q * scaling

    # ---- causal GQA attention; mask built once, all heads in this invocation
    row = jax.lax.broadcasted_iota(jnp.int32, (T, T), 0)
    col = jax.lax.broadcasted_iota(jnp.int32, (T, T), 1)
    causal = col <= row

    # dense (output) projection fused into the head loop:
    #   attn_out = sum_h ctx_h @ W_dense[h*D:(h+1)*D, :]
    attn_out = jnp.zeros((T, HIDDEN), dtype=f32)
    for h in range(NUM_HEADS):
        g = h // GQA_GROUP
        qh = q[:, h * HEAD_DIM:(h + 1) * HEAD_DIM]
        kh = k[:, g * HEAD_DIM:(g + 1) * HEAD_DIM]
        vh = v[:, g * HEAD_DIM:(g + 1) * HEAD_DIM]
        s = jnp.dot(qh, kh.T, preferred_element_type=f32)        # [T, T]
        s = jnp.where(causal, s, -1e30)
        s = s - jnp.max(s, axis=-1, keepdims=True)
        p = jnp.exp(s)
        p = p * pl.reciprocal(jnp.sum(p, axis=-1, keepdims=True), approx=True)
        ctx_h = jnp.dot(p, vh, preferred_element_type=f32)       # [T, D]
        attn_out = attn_out + jnp.dot(
            ctx_h, dense_w_ref[h * HEAD_DIM:(h + 1) * HEAD_DIM, :],
            preferred_element_type=f32)

    # ---- residual 1 (apply_residual_connection_post_layernorm=False)
    resid1 = x + attn_out

    # ---- post-attention RMSNorm
    ln2 = _rmsnorm(resid1, post_ln_ref[...].astype(f32), eps)

    # ---- MLP: two lane-aligned matmuls, SiLU(gate)*up, down proj, residual 2
    gate = jnp.dot(ln2, gate_w_ref[...], preferred_element_type=f32)
    up = jnp.dot(ln2, up_w_ref[...], preferred_element_type=f32)
    act = gate * jax.lax.logistic(gate) * up
    mlp_out = jnp.dot(act, down_w_ref[...], preferred_element_type=f32)

    o_ref[...] = (mlp_out + resid1).astype(o_ref.dtype)


def glm_block(layer, hidden_states, rope):
    T, H = hidden_states.shape
    cos_q, sin_q, cos_k, sin_k, perm_q, perm_k = rope
    args = (hidden_states, cos_q, sin_q, cos_k, sin_k, perm_q, perm_k,
            layer["input_ln"], layer["post_ln"],
            layer["qkv_w"], layer["qkv_b"], layer["dense_w"],
            layer["gate_w"], layer["up_w"], layer["down_w"])
    return pl.pallas_call(
        functools.partial(_glm_block_kernel, eps=EPS, scaling=SCALING),
        out_shape=jax.ShapeDtypeStruct((T, H), hidden_states.dtype),
        grid=(1,),
        in_specs=[_full_spec(a.shape) for a in args],
        out_specs=_full_spec((T, H)),
        compiler_params=pltpu.CompilerParams(dimension_semantics=("arbitrary",)),
    )(*args)


# ------------------------------ final RMSNorm kernel --------------------------
def _final_rmsnorm_kernel(x_ref, w_ref, o_ref, *, eps):
    x = x_ref[...].astype(jnp.float32)
    o_ref[...] = _rmsnorm(x, w_ref[...].astype(jnp.float32), eps).astype(o_ref.dtype)


def pallas_rmsnorm(x, w2d, eps=EPS):
    T, H = x.shape
    return pl.pallas_call(
        functools.partial(_final_rmsnorm_kernel, eps=eps),
        out_shape=jax.ShapeDtypeStruct((T, H), x.dtype),
        grid=(1,),
        in_specs=[_full_spec((T, H)), _full_spec((1, H))],
        out_specs=_full_spec((T, H)),
    )(x, w2d)


# ------------------------------ rotary tables (JAX glue, once/forward) --------
def build_rope_tables(positions):
    """vLLM RotaryEmbedding, rotary_dim=HEAD_DIM//2, is_neox_style=False.
    Returns lane-dense cos/sin tables tiled over heads:
      out[2i]   = x[2i]*cos_i - x[2i+1]*sin_i
      out[2i+1] = x[2i+1]*cos_i + x[2i]*sin_i
    pass-through dims get cos=1, sin=0."""
    inv_freq = 1.0 / (ROPE_BASE ** (
        jnp.arange(0, ROTARY_DIM, 2, dtype=jnp.float32) / ROTARY_DIM))
    freqs = positions.astype(jnp.float32)[:, None] * inv_freq[None, :]   # [T, rd/2]
    cos = jnp.cos(freqs)
    sin = jnp.sin(freqs)
    T = positions.shape[0]
    cos_head = jnp.repeat(cos, 2, axis=-1)                               # [T, rd]
    cos_head = jnp.concatenate(
        [cos_head, jnp.ones((T, HEAD_DIM - ROTARY_DIM), jnp.float32)], axis=-1)
    sin_head = jnp.stack([-sin, sin], axis=-1).reshape(T, ROTARY_DIM)    # [-s,+s,...]
    sin_head = jnp.concatenate(
        [sin_head, jnp.zeros((T, HEAD_DIM - ROTARY_DIM), jnp.float32)], axis=-1)
    cos_q = jnp.tile(cos_head, (1, NUM_HEADS)).astype(DTYPE)
    sin_q = jnp.tile(sin_head, (1, NUM_HEADS)).astype(DTYPE)
    cos_k = jnp.tile(cos_head, (1, NUM_KV_HEADS)).astype(DTYPE)
    sin_k = jnp.tile(sin_head, (1, NUM_KV_HEADS)).astype(DTYPE)
    return cos_q, sin_q, cos_k, sin_k


def pair_swap_perm(num_heads):
    """Per-head permutation that swaps adjacent lanes within the rotary part:
    (x @ P)[2i] = x[2i+1], (x @ P)[2i+1] = x[2i]; zero on pass-through dims."""
    size = num_heads * HEAD_DIM
    p = np.zeros((size, size), dtype=np.float32)
    for h in range(num_heads):
        base = h * HEAD_DIM
        for i in range(0, ROTARY_DIM, 2):
            p[base + i + 1, base + i] = 1.0
            p[base + i, base + i + 1] = 1.0
    return jnp.asarray(p, dtype=DTYPE)


# ------------------------------ model forward ---------------------------------
def chatglm_model_forward(params, input_ids, positions, perm_q, perm_k):
    # VocabParallelEmbedding lookup (gather -> plain JAX glue)
    hidden_states = jnp.take(params["embedding"], input_ids, axis=0)
    rope = build_rope_tables(positions) + (perm_q, perm_k)
    # GLMTransformer: one fused Pallas kernel per GLMBlock
    for layer in params["layers"]:
        hidden_states = glm_block(layer, hidden_states, rope)
    # final RMSNorm (post_layer_norm=True)
    hidden_states = pallas_rmsnorm(hidden_states, params["final_ln"])
    return hidden_states


# ------------------------------ params ---------------------------------------
def init_params(key):
    """Init in PyTorch Linear layout ([out, in]) — mirrors load_weights()."""
    def normal(k, shape, scale=0.02):
        return (scale * jax.random.normal(k, shape, dtype=jnp.float32)).astype(DTYPE)

    keys = jax.random.split(key, 1 + NUM_LAYERS)
    params = {
        "embedding": normal(keys[0], (VOCAB, HIDDEN)),
        "final_ln": jnp.ones((HIDDEN,), DTYPE),
        "layers": [],
    }
    for li in range(NUM_LAYERS):
        lk = jax.random.split(keys[1 + li], 6)
        params["layers"].append({
            "input_ln": jnp.ones((HIDDEN,), DTYPE),
            "post_ln": jnp.ones((HIDDEN,), DTYPE),
            "qkv_w": normal(lk[0], (QKV_SIZE, HIDDEN)),      # add_qkv_bias=True
            "qkv_b": normal(lk[1], (QKV_SIZE,)),
            "dense_w": normal(lk[2], (HIDDEN, Q_SIZE)),      # add_bias_linear=False
            "h_to_4h_w": normal(lk[3], (2 * FFN, HIDDEN)),
            "fourh_to_h_w": normal(lk[4], (HIDDEN, FFN)),
        })
    return params


def preprocess_params(params):
    """One-time layout prep hoisted out of the hot path:
       transpose torch [out,in] -> [in,out] for the MXU, split merged h_to_4h
       into lane-aligned gate/up, reshape 1-D LN/bias weights to [1, N]."""
    out = {
        "embedding": params["embedding"],
        "final_ln": params["final_ln"].reshape(1, HIDDEN),
        "layers": [],
    }
    for p in params["layers"]:
        w_h4h = p["h_to_4h_w"]
        out["layers"].append({
            "input_ln": p["input_ln"].reshape(1, HIDDEN),
            "post_ln": p["post_ln"].reshape(1, HIDDEN),
            "qkv_w": p["qkv_w"].T,                 # [H, QKV_SIZE]
            "qkv_b": p["qkv_b"].reshape(1, QKV_SIZE),
            "dense_w": p["dense_w"].T,             # [Q_SIZE, H]
            "gate_w": w_h4h[:FFN].T,               # [H, FFN]  (SiluAndMul gate half)
            "up_w": w_h4h[FFN:].T,                 # [H, FFN]  (SiluAndMul up half)
            "down_w": p["fourh_to_h_w"].T,         # [FFN, H]
        })
    return out


# ------------------------------ main ------------------------------------------
if __name__ == "__main__":
    key = jax.random.PRNGKey(0)
    pkey, ikey = jax.random.split(key)
    params = preprocess_params(init_params(pkey))
    perm_q = pair_swap_perm(NUM_HEADS)
    perm_k = pair_swap_perm(NUM_KV_HEADS)

    input_ids = jax.random.randint(ikey, (SEQ,), 0, VOCAB, dtype=jnp.int32)
    positions = jnp.arange(SEQ, dtype=jnp.int32)

    fwd = jax.jit(chatglm_model_forward)
    out = fwd(params, input_ids, positions, perm_q, perm_k)
    out = jax.block_until_ready(out)
    assert out.shape == (SEQ, HIDDEN), out.shape
    assert jnp.all(jnp.isfinite(out))
    print("KERNEL_OK")
</pallas_src>

<mosaic_0001>
module attributes {stable_mosaic.version = 11 : i64} {
  func.func @_final_rmsnorm_kernel(%arg0: i32, %arg1: memref<8x32xf32, #tpu.memory_space<vmem>>, %arg2: memref<1x32xf32, #tpu.memory_space<vmem>>, %arg3: memref<8x32xf32, #tpu.memory_space<vmem>>) attributes {dimension_semantics = [#tpu.dimension_semantics<arbitrary>], iteration_bounds = array<i64: 1>, scalar_prefetch = 0 : i64, scratch_operands = 0 : i64, tpu.core_type = #tpu.core_type<tc>, window_params = [{pipeline_mode = #tpu.pipeline_mode<synchronous>, transform_indices = @transform_0, window_bounds = array<i64: 8, 32>}, {pipeline_mode = #tpu.pipeline_mode<synchronous>, transform_indices = @transform_1, window_bounds = array<i64: 1, 32>}, {pipeline_mode = #tpu.pipeline_mode<synchronous>, transform_indices = @transform_2, window_bounds = array<i64: 8, 32>}]} {
    %c0 = arith.constant 0 : index
    %c0_0 = arith.constant 0 : index
    %0 = vector.load %arg1[%c0, %c0_0] : memref<8x32xf32, #tpu.memory_space<vmem>>, vector<8x32xf32>
    %c0_1 = arith.constant 0 : index
    %c0_2 = arith.constant 0 : index
    %1 = vector.load %arg2[%c0_1, %c0_2] : memref<1x32xf32, #tpu.memory_space<vmem>>, vector<1x32xf32>
    %2 = arith.mulf %0, %0 : vector<8x32xf32>
    %cst = arith.constant dense<0.000000e+00> : vector<8xf32>
    %3 = vector.multi_reduction <add>, %2, %cst [1] : vector<8x32xf32> to vector<8xf32>
    %4 = vector.shape_cast %3 : vector<8xf32> to vector<8x1xf32>
    %cst_3 = arith.constant 3.200000e+01 : f32
    %5 = vector.broadcast %cst_3 : f32 to vector<8x1xf32>
    %6 = arith.divf %4, %5 : vector<8x1xf32>
    %cst_4 = arith.constant 9.99999974E-6 : f32
    %7 = vector.broadcast %cst_4 : f32 to vector<8x1xf32>
    %8 = arith.addf %6, %7 : vector<8x1xf32>
    %9 = math.rsqrt %8 : vector<8x1xf32>
    %10 = vector.broadcast %9 : vector<8x1xf32> to vector<8x32xf32>
    %11 = arith.mulf %0, %10 : vector<8x32xf32>
    %12 = vector.broadcast %1 : vector<1x32xf32> to vector<8x32xf32>
    %13 = arith.mulf %11, %12 : vector<8x32xf32>
    %c0_5 = arith.constant 0 : index
    %c0_6 = arith.constant 0 : index
    %14 = vector.load %arg3[%c0_5, %c0_6] : memref<8x32xf32, #tpu.memory_space<vmem>>, vector<8x32xf32>
    tpu.vector_store %arg3[%c0_5, %c0_6], %13 {strides = array<i32>} : memref<8x32xf32, #tpu.memory_space<vmem>>, vector<8x32xf32>,
    return
  }
  func.func @transform_0(%arg0: i32) -> (i32, i32) {
    %c0_i32 = arith.constant 0 : i32
    %c0_i32_0 = arith.constant 0 : i32
    %c0_i32_1 = arith.constant 0 : i32
    return %c0_i32, %c0_i32_0 : i32, i32
  }
  func.func @transform_1(%arg0: i32) -> (i32, i32) {
    %c0_i32 = arith.constant 0 : i32
    %c0_i32_0 = arith.constant 0 : i32
    %c0_i32_1 = arith.constant 0 : i32
    return %c0_i32, %c0_i32_0 : i32, i32
  }
  func.func @transform_2(%arg0: i32) -> (i32, i32) {
    %c0_i32 = arith.constant 0 : i32
    %c0_i32_0 = arith.constant 0 : i32
    %c0_i32_1 = arith.constant 0 : i32
    return %c0_i32, %c0_i32_0 : i32, i32
  }
}

module attributes {stable_mosaic.version = 11 : i64} {
  func.func @_glm_block_kernel(%arg0: i32, %arg1: memref<8x32xf32, #tpu.memory_space<vmem>>, %arg2: memref<8x32xf32, #tpu.memory_space<vmem>>, %arg3: memref<8x32xf32, #tpu.memory_space<vmem>>, %arg4: memref<8x16xf32, #tpu.memory_space<vmem>>, %arg5: memref<8x16xf32, #tpu.memory_space<vmem>>, %arg6: memref<32x32xf32, #tpu.memory_space<vmem>>, %arg7: memref<16x16xf32, #tpu.memory_space<vmem>>, %arg8: memref<1x32xf32, #tpu.memory_space<vmem>>, %arg9: memref<1x32xf32, #tpu.memory_space<vmem>>, %arg10: memref<32x64xf32, #tpu.memory_space<vmem>>, %arg11: memref<1x64xf32, #tpu.memory_space<vmem>>, %arg12: memref<32x32xf32, #tpu.memory_space<vmem>>, %arg13: memref<32x64xf32, #tpu.memory_space<vmem>>, %arg14: memref<32x64xf32, #tpu.memory_space<vmem>>, %arg15: memref<64x32xf32, #tpu.memory_space<vmem>>, %arg16: memref<8x32xf32, #tpu.memory_space<vmem>>) attributes {dimension_semantics = [#tpu.dimension_semantics<arbitrary>], iteration_bounds = array<i64: 1>, scalar_prefetch = 0 : i64, scratch_operands = 0 : i64, tpu.core_type = #tpu.core_type<tc>, window_params = [{pipeline_mode = #tpu.pipeline_mode<synchronous>, transform_indices = @transform_0, window_bounds = array<i64: 8, 32>}, {pipeline_mode = #tpu.pipeline_mode<synchronous>, transform_indices = @transform_1, window_bounds = array<i64: 8, 32>}, {pipeline_mode = #tpu.pipeline_mode<synchronous>, transform_indices = @transform_2, window_bounds = array<i64: 8, 32>}, {pipeline_mode = #tpu.pipeline_mode<synchronous>, transform_indices = @transform_3, window_bounds = array<i64: 8, 16>}, {pipeline_mode = #tpu.pipeline_mode<synchronous>, transform_indices = @transform_4, window_bounds = array<i64: 8, 16>}, {pipeline_mode = #tpu.pipeline_mode<synchronous>, transform_indices = @transform_5, window_bounds = array<i64: 32, 32>}, {pipeline_mode = #tpu.pipeline_mode<synchronous>, transform_indices = @transform_6, window_bounds = array<i64: 16, 16>}, {pipeline_mode = #tpu.pipeline_mode<synchronous>, transform_indices = @transform_7, window_bounds = array<i64: 1, 32>}, {pipeline_mode = #tpu.pipeline_mode<synchronous>, transform_indices = @transform_8, window_bounds = array<i64: 1, 32>}, {pipeline_mode = #tpu.pipeline_mode<synchronous>, transform_indices = @transform_9, window_bounds = array<i64: 32, 64>}, {pipeline_mode = #tpu.pipeline_mode<synchronous>, transform_indices = @transform_10, window_bounds = array<i64: 1, 64>}, {pipeline_mode = #tpu.pipeline_mode<synchronous>, transform_indices = @transform_11, window_bounds = array<i64: 32, 32>}, {pipeline_mode = #tpu.pipeline_mode<synchronous>, transform_indices = @transform_12, window_bounds = array<i64: 32, 64>}, {pipeline_mode = #tpu.pipeline_mode<synchronous>, transform_indices = @transform_13, window_bounds = array<i64: 32, 64>}, {pipeline_mode = #tpu.pipeline_mode<synchronous>, transform_indices = @transform_14, window_bounds = array<i64: 64, 32>}, {pipeline_mode = #tpu.pipeline_mode<synchronous>, transform_indices = @transform_15, window_bounds = array<i64: 8, 32>}]} {
    %c0 = arith.constant 0 : index
    %c0_0 = arith.constant 0 : index
    %0 = vector.load %arg1[%c0, %c0_0] : memref<8x32xf32, #tpu.memory_space<vmem>>, vector<8x32xf32>
    %c0_1 = arith.constant 0 : index
    %c0_2 = arith.constant 0 : index
    %1 = vector.load %arg8[%c0_1, %c0_2] : memref<1x32xf32, #tpu.memory_space<vmem>>, vector<1x32xf32>
    %2 = arith.mulf %0, %0 : vector<8x32xf32>
    %cst = arith.constant dense<0.000000e+00> : vector<8xf32>
    %3 = vector.multi_reduction <add>, %2, %cst [1] : vector<8x32xf32> to vector<8xf32>
    %4 = vector.shape_cast %3 : vector<8xf32> to vector<8x1xf32>
    %cst_3 = arith.constant 3.200000e+01 : f32
    %5 = vector.broadcast %cst_3 : f32 to vector<8x1xf32>
    %6 = arith.divf %4, %5 : vector<8x1xf32>
    %cst_4 = arith.constant 9.99999974E-6 : f32
    %7 = vector.broadcast %cst_4 : f32 to vector<8x1xf32>
    %8 = arith.addf %6, %7 : vector<8x1xf32>
    %9 = math.rsqrt %8 : vector<8x1xf32>
    %10 = vector.broadcast %9 : vector<8x1xf32> to vector<8x32xf32>
    %11 = arith.mulf %0, %10 : vector<8x32xf32>
    %12 = vector.broadcast %1 : vector<1x32xf32> to vector<8x32xf32>
    %13 = arith.mulf %11, %12 : vector<8x32xf32>
    %c0_5 = arith.constant 0 : index
    %c0_6 = arith.constant 0 : index
    %14 = vector.load %arg10[%c0_5, %c0_6] : memref<32x64xf32, #tpu.memory_space<vmem>>, vector<32x64xf32>
    %cst_7 = arith.constant dense<0.000000e+00> : vector<8x64xf32>
    %15 = tpu.matmul %13, %14, %cst_7 {dimension_numbers = #tpu.dot_dimension_numbers<[1], [0], [0], [1], [0, 0, 1, 1], [], []>} : vector<8x32xf32>, vector<32x64xf32>, vector<8x64xf32> -> vector<8x64xf32>
    %c0_8 = arith.constant 0 : index
    %c0_9 = arith.constant 0 : index
    %16 = vector.load %arg11[%c0_8, %c0_9] : memref<1x64xf32, #tpu.memory_space<vmem>>, vector<1x64xf32>
    %17 = vector.broadcast %16 : vector<1x64xf32> to vector<8x64xf32>
    %18 = arith.addf %15, %17 : vector<8x64xf32>
    %19 = vector.extract_strided_slice %18 {offsets = [0, 0], sizes = [8, 32], strides = [1, 1]} : vector<8x64xf32> to vector<8x32xf32>
    %20 = vector.extract_strided_slice %18 {offsets = [0, 32], sizes = [8, 16], strides = [1, 1]} : vector<8x64xf32> to vector<8x16xf32>
    %21 = vector.extract_strided_slice %18 {offsets = [0, 48], sizes = [8, 16], strides = [1, 1]} : vector<8x64xf32> to vector<8x16xf32>
    %c0_10 = arith.constant 0 : index
    %c0_11 = arith.constant 0 : index
    %22 = vector.load %arg2[%c0_10, %c0_11] : memref<8x32xf32, #tpu.memory_space<vmem>>, vector<8x32xf32>
    %23 = arith.mulf %19, %22 : vector<8x32xf32>
    %c0_12 = arith.constant 0 : index
    %c0_13 = arith.constant 0 : index
    %24 = vector.load %arg6[%c0_12, %c0_13] : memref<32x32xf32, #tpu.memory_space<vmem>>, vector<32x32xf32>
    %cst_14 = arith.constant dense<0.000000e+00> : vector<8x32xf32>
    %25 = tpu.matmul %19, %24, %cst_14 {dimension_numbers = #tpu.dot_dimension_numbers<[1], [0], [0], [1], [0, 0, 1, 1], [], []>} : vector<8x32xf32>, vector<32x32xf32>, vector<8x32xf32> -> vector<8x32xf32>
    %c0_15 = arith.constant 0 : index
    %c0_16 = arith.constant 0 : index
    %26 = vector.load %arg3[%c0_15, %c0_16] : memref<8x32xf32, #tpu.memory_space<vmem>>, vector<8x32xf32>
    %27 = arith.mulf %25, %26 : vector<8x32xf32>
    %28 = arith.addf %23, %27 : vector<8x32xf32>
    %c0_17 = arith.constant 0 : index
    %c0_18 = arith.constant 0 : index
    %29 = vector.load %arg4[%c0_17, %c0_18] : memref<8x16xf32, #tpu.memory_space<vmem>>, vector<8x16xf32>
    %30 = arith.mulf %20, %29 : vector<8x16xf32>
    %c0_19 = arith.constant 0 : index
    %c0_20 = arith.constant 0 : index
    %31 = vector.load %arg7[%c0_19, %c0_20] : memref<16x16xf32, #tpu.memory_space<vmem>>, vector<16x16xf32>
    %cst_21 = arith.constant dense<0.000000e+00> : vector<8x16xf32>
    %32 = tpu.matmul %20, %31, %cst_21 {dimension_numbers = #tpu.dot_dimension_numbers<[1], [0], [0], [1], [0, 0, 1, 1], [], []>} : vector<8x16xf32>, vector<16x16xf32>, vector<8x16xf32> -> vector<8x16xf32>
    %c0_22 = arith.constant 0 : index
    %c0_23 = arith.constant 0 : index
    %33 = vector.load %arg5[%c0_22, %c0_23] : memref<8x16xf32, #tpu.memory_space<vmem>>, vector<8x16xf32>
    %34 = arith.mulf %32, %33 : vector<8x16xf32>
    %35 = arith.addf %30, %34 : vector<8x16xf32>
    %cst_24 = arith.constant 0.353553385 : f32
    %36 = vector.broadcast %cst_24 : f32 to vector<8x32xf32>
    %37 = arith.mulf %28, %36 : vector<8x32xf32>
    %38 = tpu.iota {dimensions = array<i32: 0>} : vector<8x8xi32>
    %39 = tpu.iota {dimensions = array<i32: 1>} : vector<8x8xi32>
    %40 = arith.cmpi sle, %39, %38 : vector<8x8xi32>
    %cst_25 = arith.constant 0.000000e+00 : f32
    %41 = vector.broadcast %cst_25 : f32 to vector<8x32xf32>
    %42 = vector.extract_strided_slice %37 {offsets = [0, 0], sizes = [8, 8], strides = [1, 1]} : vector<8x32xf32> to vector<8x8xf32>
    %43 = vector.extract_strided_slice %35 {offsets = [0, 0], sizes = [8, 8], strides = [1, 1]} : vector<8x16xf32> to vector<8x8xf32>
    %44 = vector.extract_strided_slice %21 {offsets = [0, 0], sizes = [8, 8], strides = [1, 1]} : vector<8x16xf32> to vector<8x8xf32>
    %45 = tpu.transpose %43, [1, 0] : vector<8x8xf32> -> vector<8x8xf32>
    %cst_26 = arith.constant dense<0.000000e+00> : vector<8x8xf32>
    %46 = tpu.matmul %42, %45, %cst_26 {dimension_numbers = #tpu.dot_dimension_numbers<[1], [0], [0], [1], [0, 0, 1, 1], [], []>} : vector<8x8xf32>, vector<8x8xf32>, vector<8x8xf32> -> vector<8x8xf32>
    %cst_27 = arith.constant -1.000000e+30 : f32
    %47 = vector.broadcast %cst_27 : f32 to vector<8x8xf32>
    %48 = arith.select %40, %46, %47 : vector<8x8xi1>, vector<8x8xf32>
    %cst_28 = arith.constant dense<0xFF800000> : vector<8xf32>
    %49 = vector.multi_reduction <maximumf>, %48, %cst_28 [1] : vector<8x8xf32> to vector<8xf32>
    %50 = vector.shape_cast %49 : vector<8xf32> to vector<8x1xf32>
    %51 = vector.broadcast %50 : vector<8x1xf32> to vector<8x8xf32>
    %52 = arith.subf %48, %51 : vector<8x8xf32>
    %53 = math.exp %52 : vector<8x8xf32>
    %cst_29 = arith.constant dense<0.000000e+00> : vector<8xf32>
    %54 = vector.multi_reduction <add>, %53, %cst_29 [1] : vector<8x8xf32> to vector<8xf32>
    %55 = vector.shape_cast %54 : vector<8xf32> to vector<8x1xf32>
    %56 = tpu.reciprocal %55 {approx = true} : vector<8x1xf32> -> vector<8x1xf32>
    %57 = vector.broadcast %56 : vector<8x1xf32> to vector<8x8xf32>
    %58 = arith.mulf %53, %57 : vector<8x8xf32>
    %cst_30 = arith.constant dense<0.000000e+00> : vector<8x8xf32>
    %59 = tpu.matmul %58, %44, %cst_30 {dimension_numbers = #tpu.dot_dimension_numbers<[1], [0], [0], [1], [0, 0, 1, 1], [], []>} : vector<8x8xf32>, vector<8x8xf32>, vector<8x8xf32> -> vector<8x8xf32>
    %c0_31 = arith.constant 0 : index
    %c0_32 = arith.constant 0 : index
    %60 = vector.load %arg12[%c0_31, %c0_32] : memref<32x32xf32, #tpu.memory_space<vmem>>, vector<8x32xf32>
    %cst_33 = arith.constant dense<0.000000e+00> : vector<8x32xf32>
    %61 = tpu.matmul %59, %60, %cst_33 {dimension_numbers = #tpu.dot_dimension_numbers<[1], [0], [0], [1], [0, 0, 1, 1], [], []>} : vector<8x8xf32>, vector<8x32xf32>, vector<8x32xf32> -> vector<8x32xf32>
    %62 = arith.addf %41, %61 : vector<8x32xf32>
    %63 = vector.extract_strided_slice %37 {offsets = [0, 8], sizes = [8, 8], strides = [1, 1]} : vector<8x32xf32> to vector<8x8xf32>
    %64 = vector.extract_strided_slice %35 {offsets = [0, 0], sizes = [8, 8], strides = [1, 1]} : vector<8x16xf32> to vector<8x8xf32>
    %65 = vector.extract_strided_slice %21 {offsets = [0, 0], sizes = [8, 8], strides = [1, 1]} : vector<8x16xf32> to vector<8x8xf32>
    %66 = tpu.transpose %64, [1, 0] : vector<8x8xf32> -> vector<8x8xf32>
    %cst_34 = arith.constant dense<0.000000e+00> : vector<8x8xf32>
    %67 = tpu.matmul %63, %66, %cst_34 {dimension_numbers = #tpu.dot_dimension_numbers<[1], [0], [0], [1], [0, 0, 1, 1], [], []>} : vector<8x8xf32>, vector<8x8xf32>, vector<8x8xf32> -> vector<8x8xf32>
    %cst_35 = arith.constant -1.000000e+30 : f32
    %68 = vector.broadcast %cst_35 : f32 to vector<8x8xf32>
    %69 = arith.select %40, %67, %68 : vector<8x8xi1>, vector<8x8xf32>
    %cst_36 = arith.constant dense<0xFF800000> : vector<8xf32>
    %70 = vector.multi_reduction <maximumf>, %69, %cst_36 [1] : vector<8x8xf32> to vector<8xf32>
    %71 = vector.shape_cast %70 : vector<8xf32> to vector<8x1xf32>
    %72 = vector.broadcast %71 : vector<8x1xf32> to vector<8x8xf32>
    %73 = arith.subf %69, %72 : vector<8x8xf32>
    %74 = math.exp %73 : vector<8x8xf32>
    %cst_37 = arith.constant dense<0.000000e+00> : vector<8xf32>
    %75 = vector.multi_reduction <add>, %74, %cst_37 [1] : vector<8x8xf32> to vector<8xf32>
    %76 = vector.shape_cast %75 : vector<8xf32> to vector<8x1xf32>
    %77 = tpu.reciprocal %76 {approx = true} : vector<8x1xf32> -> vector<8x1xf32>
    %78 = vector.broadcast %77 : vector<8x1xf32> to vector<8x8xf32>
    %79 = arith.mulf %74, %78 : vector<8x8xf32>
    %cst_38 = arith.constant dense<0.000000e+00> : vector<8x8xf32>
    %80 = tpu.matmul %79, %65, %cst_38 {dimension_numbers = #tpu.dot_dimension_numbers<[1], [0], [0], [1], [0, 0, 1, 1], [], []>} : vector<8x8xf32>, vector<8x8xf32>, vector<8x8xf32> -> vector<8x8xf32>
    %c8 = arith.constant 8 : index
    %c0_39 = arith.constant 0 : index
    %81 = vector.load %arg12[%c8, %c0_39] : memref<32x32xf32, #tpu.memory_space<vmem>>, vector<8x32xf32>
    %cst_40 = arith.constant dense<0.000000e+00> : vector<8x32xf32>
    %82 = tpu.matmul %80, %81, %cst_40 {dimension_numbers = #tpu.dot_dimension_numbers<[1], [0], [0], [1], [0, 0, 1, 1], [], []>} : vector<8x8xf32>, vector<8x32xf32>, vector<8x32xf32> -> vector<8x32xf32>
    %83 = arith.addf %62, %82 : vector<8x32xf32>
    %84 = vector.extract_strided_slice %37 {offsets = [0, 16], sizes = [8, 8], strides = [1, 1]} : vector<8x32xf32> to vector<8x8xf32>
    %85 = vector.extract_strided_slice %35 {offsets = [0, 8], sizes = [8, 8], strides = [1, 1]} : vector<8x16xf32> to vector<8x8xf32>
    %86 = vector.extract_strided_slice %21 {offsets = [0, 8], sizes = [8, 8], strides = [1, 1]} : vector<8x16xf32> to vector<8x8xf32>
    %87 = tpu.transpose %85, [1, 0] : vector<8x8xf32> -> vector<8x8xf32>
    %cst_41 = arith.constant dense<0.000000e+00> : vector<8x8xf32>
    %88 = tpu.matmul %84, %87, %cst_41 {dimension_numbers = #tpu.dot_dimension_numbers<[1], [0], [0], [1], [0, 0, 1, 1], [], []>} : vector<8x8xf32>, vector<8x8xf32>, vector<8x8xf32> -> vector<8x8xf32>
    %cst_42 = arith.constant -1.000000e+30 : f32
    %89 = vector.broadcast %cst_42 : f32 to vector<8x8xf32>
    %90 = arith.select %40, %88, %89 : vector<8x8xi1>, vector<8x8xf32>
    %cst_43 = arith.constant dense<0xFF800000> : vector<8xf32>
    %91 = vector.multi_reduction <maximumf>, %90, %cst_43 [1] : vector<8x8xf32> to vector<8xf32>
    %92 = vector.shape_cast %91 : vector<8xf32> to vector<8x1xf32>
    %93 = vector.broadcast %92 : vector<8x1xf32> to vector<8x8xf32>
    %94 = arith.subf %90, %93 : vector<8x8xf32>
    %95 = math.exp %94 : vector<8x8xf32>
    %cst_44 = arith.constant dense<0.000000e+00> : vector<8xf32>
    %96 = vector.multi_reduction <add>, %95, %cst_44 [1] : vector<8x8xf32> to vector<8xf32>
    %97 = vector.shape_cast %96 : vector<8xf32> to vector<8x1xf32>
    %98 = tpu.reciprocal %97 {approx = true} : vector<8x1xf32> -> vector<8x1xf32>
    %99 = vector.broadcast %98 : vector<8x1xf32> to vector<8x8xf32>
    %100 = arith.mulf %95, %99 : vector<8x8xf32>
    %cst_45 = arith.constant dense<0.000000e+00> : vector<8x8xf32>
    %101 = tpu.matmul %100, %86, %cst_45 {dimension_numbers = #tpu.dot_dimension_numbers<[1], [0], [0], [1], [0, 0, 1, 1], [], []>} : vector<8x8xf32>, vector<8x8xf32>, vector<8x8xf32> -> vector<8x8xf32>
    %c16 = arith.constant 16 : index
    %c0_46 = arith.constant 0 : index
    %102 = vector.load %arg12[%c16, %c0_46] : memref<32x32xf32, #tpu.memory_space<vmem>>, vector<8x32xf32>
    %cst_47 = arith.constant dense<0.000000e+00> : vector<8x32xf32>
    %103 = tpu.matmul %101, %102, %cst_47 {dimension_numbers = #tpu.dot_dimension_numbers<[1], [0], [0], [1], [0, 0, 1, 1], [], []>} : vector<8x8xf32>, vector<8x32xf32>, vector<8x32xf32> -> vector<8x32xf32>
    %104 = arith.addf %83, %103 : vector<8x32xf32>
    %105 = vector.extract_strided_slice %37 {offsets = [0, 24], sizes = [8, 8], strides = [1, 1]} : vector<8x32xf32> to vector<8x8xf32>
    %106 = vector.extract_strided_slice %35 {offsets = [0, 8], sizes = [8, 8], strides = [1, 1]} : vector<8x16xf32> to vector<8x8xf32>
    %107 = vector.extract_strided_slice %21 {offsets = [0, 8], sizes = [8, 8], strides = [1, 1]} : vector<8x16xf32> to vector<8x8xf32>
    %108 = tpu.transpose %106, [1, 0] : vector<8x8xf32> -> vector<8x8xf32>
    %cst_48 = arith.constant dense<0.000000e+00> : vector<8x8xf32>
    %109 = tpu.matmul %105, %108, %cst_48 {dimension_numbers = #tpu.dot_dimension_numbers<[1], [0], [0], [1], [0, 0, 1, 1], [], []>} : vector<8x8xf32>, vector<8x8xf32>, vector<8x8xf32> -> vector<8x8xf32>
    %cst_49 = arith.constant -1.000000e+30 : f32
    %110 = vector.broadcast %cst_49 : f32 to vector<8x8xf32>
    %111 = arith.select %40, %109, %110 : vector<8x8xi1>, vector<8x8xf32>
    %cst_50 = arith.constant dense<0xFF800000> : vector<8xf32>
    %112 = vector.multi_reduction <maximumf>, %111, %cst_50 [1] : vector<8x8xf32> to vector<8xf32>
    %113 = vector.shape_cast %112 : vector<8xf32> to vector<8x1xf32>
    %114 = vector.broadcast %113 : vector<8x1xf32> to vector<8x8xf32>
    %115 = arith.subf %111, %114 : vector<8x8xf32>
    %116 = math.exp %115 : vector<8x8xf32>
    %cst_51 = arith.constant dense<0.000000e+00> : vector<8xf32>
    %117 = vector.multi_reduction <add>, %116, %cst_51 [1] : vector<8x8xf32> to vector<8xf32>
    %118 = vector.shape_cast %117 : vector<8xf32> to vector<8x1xf32>
    %119 = tpu.reciprocal %118 {approx = true} : vector<8x1xf32> -> vector<8x1xf32>
    %120 = vector.broadcast %119 : vector<8x1xf32> to vector<8x8xf32>
    %121 = arith.mulf %116, %120 : vector<8x8xf32>
    %cst_52 = arith.constant dense<0.000000e+00> : vector<8x8xf32>
    %122 = tpu.matmul %121, %107, %cst_52 {dimension_numbers = #tpu.dot_dimension_numbers<[1], [0], [0], [1], [0, 0, 1, 1], [], []>} : vector<8x8xf32>, vector<8x8xf32>, vector<8x8xf32> -> vector<8x8xf32>
    %c24 = arith.constant 24 : index
    %c0_53 = arith.constant 0 : index
    %123 = vector.load %arg12[%c24, %c0_53] : memref<32x32xf32, #tpu.memory_space<vmem>>, vector<8x32xf32>
    %cst_54 = arith.constant dense<0.000000e+00> : vector<8x32xf32>
    %124 = tpu.matmul %122, %123, %cst_54 {dimension_numbers = #tpu.dot_dimension_numbers<[1], [0], [0], [1], [0, 0, 1, 1], [], []>} : vector<8x8xf32>, vector<8x32xf32>, vector<8x32xf32> -> vector<8x32xf32>
    %125 = arith.addf %104, %124 : vector<8x32xf32>
    %126 = arith.addf %0, %125 : vector<8x32xf32>
    %c0_55 = arith.constant 0 : index
    %c0_56 = arith.constant 0 : index
    %127 = vector.load %arg9[%c0_55, %c0_56] : memref<1x32xf32, #tpu.memory_space<vmem>>, vector<1x32xf32>
    %128 = arith.mulf %126, %126 : vector<8x32xf32>
    %cst_57 = arith.constant dense<0.000000e+00> : vector<8xf32>
    %129 = vector.multi_reduction <add>, %128, %cst_57 [1] : vector<8x32xf32> to vector<8xf32>
    %130 = vector.shape_cast %129 : vector<8xf32> to vector<8x1xf32>
    %cst_58 = arith.constant 3.200000e+01 : f32
    %131 = vector.broadcast %cst_58 : f32 to vector<8x1xf32>
    %132 = arith.divf %130, %131 : vector<8x1xf32>
    %cst_59 = arith.constant 9.99999974E-6 : f32
    %133 = vector.broadcast %cst_59 : f32 to vector<8x1xf32>
    %134 = arith.addf %132, %133 : vector<8x1xf32>
    %135 = math.rsqrt %134 : vector<8x1xf32>
    %136 = vector.broadcast %135 : vector<8x1xf32> to vector<8x32xf32>
    %137 = arith.mulf %126, %136 : vector<8x32xf32>
    %138 = vector.broadcast %127 : vector<1x32xf32> to vector<8x32xf32>
    %139 = arith.mulf %137, %138 : vector<8x32xf32>
    %c0_60 = arith.constant 0 : index
    %c0_61 = arith.constant 0 : index
    %140 = vector.load %arg13[%c0_60, %c0_61] : memref<32x64xf32, #tpu.memory_space<vmem>>, vector<32x64xf32>
    %cst_62 = arith.constant dense<0.000000e+00> : vector<8x64xf32>
    %141 = tpu.matmul %139, %140, %cst_62 {dimension_numbers = #tpu.dot_dimension_numbers<[1], [0], [0], [1], [0, 0, 1, 1], [], []>} : vector<8x32xf32>, vector<32x64xf32>, vector<8x64xf32> -> vector<8x64xf32>
    %c0_63 = arith.constant 0 : index
    %c0_64 = arith.constant 0 : index
    %142 = vector.load %arg14[%c0_63, %c0_64] : memref<32x64xf32, #tpu.memory_space<vmem>>, vector<32x64xf32>
    %cst_65 = arith.constant dense<0.000000e+00> : vector<8x64xf32>
    %143 = tpu.matmul %139, %142, %cst_65 {dimension_numbers = #tpu.dot_dimension_numbers<[1], [0], [0], [1], [0, 0, 1, 1], [], []>} : vector<8x32xf32>, vector<32x64xf32>, vector<8x64xf32> -> vector<8x64xf32>
    %144 = arith.negf %141 : vector<8x64xf32>
    %145 = math.exp %144 : vector<8x64xf32>
    %cst_66 = arith.constant 1.000000e+00 : f32
    %146 = vector.broadcast %cst_66 : f32 to vector<8x64xf32>
    %147 = arith.addf %146, %145 : vector<8x64xf32>
    %148 = arith.divf %146, %147 : vector<8x64xf32>
    %149 = arith.mulf %141, %148 : vector<8x64xf32>
    %150 = arith.mulf %149, %143 : vector<8x64xf32>
    %c0_67 = arith.constant 0 : index
    %c0_68 = arith.constant 0 : index
    %151 = vector.load %arg15[%c0_67, %c0_68] : memref<64x32xf32, #tpu.memory_space<vmem>>, vector<64x32xf32>
    %cst_69 = arith.constant dense<0.000000e+00> : vector<8x32xf32>
    %152 = tpu.matmul %150, %151, %cst_69 {dimension_numbers = #tpu.dot_dimension_numbers<[1], [0], [0], [1], [0, 0, 1, 1], [], []>} : vector<8x64xf32>, vector<64x32xf32>, vector<8x32xf32> -> vector<8x32xf32>
    %153 = arith.addf %152, %126 : vector<8x32xf32>
    %c0_70 = arith.constant 0 : index
    %c0_71 = arith.constant 0 : index
    %154 = vector.load %arg16[%c0_70, %c0_71] : memref<8x32xf32, #tpu.memory_space<vmem>>, vector<8x32xf32>
    tpu.vector_store %arg16[%c0_70, %c0_71], %153 {strides = array<i32>} : memref<8x32xf32, #tpu.memory_space<vmem>>, vector<8x32xf32>,
    return
  }
  func.func @transform_0(%arg0: i32) -> (i32, i32) {
    %c0_i32 = arith.constant 0 : i32
    %c0_i32_0 = arith.constant 0 : i32
    %c0_i32_1 = arith.constant 0 : i32
    return %c0_i32, %c0_i32_0 : i32, i32
  }
  func.func @transform_1(%arg0: i32) -> (i32, i32) {
    %c0_i32 = arith.constant 0 : i32
    %c0_i32_0 = arith.constant 0 : i32
    %c0_i32_1 = arith.constant 0 : i32
    return %c0_i32, %c0_i32_0 : i32, i32
  }
  func.func @transform_2(%arg0: i32) -> (i32, i32) {
    %c0_i32 = arith.constant 0 : i32
    %c0_i32_0 = arith.constant 0 : i32
    %c0_i32_1 = arith.constant 0 : i32
    return %c0_i32, %c0_i32_0 : i32, i32
  }
  func.func @transform_3(%arg0: i32) -> (i32, i32) {
    %c0_i32 = arith.constant 0 : i32
    %c0_i32_0 = arith.constant 0 : i32
    %c0_i32_1 = arith.constant 0 : i32
    return %c0_i32, %c0_i32_0 : i32, i32
  }
  func.func @transform_4(%arg0: i32) -> (i32, i32) {
    %c0_i32 = arith.constant 0 : i32
    %c0_i32_0 = arith.constant 0 : i32
    %c0_i32_1 = arith.constant 0 : i32
    return %c0_i32, %c0_i32_0 : i32, i32
  }
  func.func @transform_5(%arg0: i32) -> (i32, i32) {
    %c0_i32 = arith.constant 0 : i32
    %c0_i32_0 = arith.constant 0 : i32
    %c0_i32_1 = arith.constant 0 : i32
    return %c0_i32, %c0_i32_0 : i32, i32
  }
  func.func @transform_6(%arg0: i32) -> (i32, i32) {
    %c0_i32 = arith.constant 0 : i32
    %c0_i32_0 = arith.constant 0 : i32
    %c0_i32_1 = arith.constant 0 : i32
    return %c0_i32, %c0_i32_0 : i32, i32
  }
  func.func @transform_7(%arg0: i32) -> (i32, i32) {
    %c0_i32 = arith.constant 0 : i32
    %c0_i32_0 = arith.constant 0 : i32
    %c0_i32_1 = arith.constant 0 : i32
    return %c0_i32, %c0_i32_0 : i32, i32
  }
  func.func @transform_8(%arg0: i32) -> (i32, i32) {
    %c0_i32 = arith.constant 0 : i32
    %c0_i32_0 = arith.constant 0 : i32
    %c0_i32_1 = arith.constant 0 : i32
    return %c0_i32, %c0_i32_0 : i32, i32
  }
  func.func @transform_9(%arg0: i32) -> (i32, i32) {
    %c0_i32 = arith.constant 0 : i32
    %c0_i32_0 = arith.constant 0 : i32
    %c0_i32_1 = arith.constant 0 : i32
    return %c0_i32, %c0_i32_0 : i32, i32
  }
  func.func @transform_10(%arg0: i32) -> (i32, i32) {
    %c0_i32 = arith.constant 0 : i32
    %c0_i32_0 = arith.constant 0 : i32
    %c0_i32_1 = arith.constant 0 : i32
    return %c0_i32, %c0_i32_0 : i32, i32
  }
  func.func @transform_11(%arg0: i32) -> (i32, i32) {
    %c0_i32 = arith.constant 0 : i32
    %c0_i32_0 = arith.constant 0 : i32
    %c0_i32_1 = arith.constant 0 : i32
    return %c0_i32, %c0_i32_0 : i32, i32
  }
  func.func @transform_12(%arg0: i32) -> (i32, i32) {
    %c0_i32 = arith.constant 0 : i32
    %c0_i32_0 = arith.constant 0 : i32
    %c0_i32_1 = arith.constant 0 : i32
    return %c0_i32, %c0_i32_0 : i32, i32
  }
  func.func @transform_13(%arg0: i32) -> (i32, i32) {
    %c0_i32 = arith.constant 0 : i32
    %c0_i32_0 = arith.constant 0 : i32
    %c0_i32_1 = arith.constant 0 : i32
    return %c0_i32, %c0_i32_0 : i32, i32
  }
  func.func @transform_14(%arg0: i32) -> (i32, i32) {
    %c0_i32 = arith.constant 0 : i32
    %c0_i32_0 = arith.constant 0 : i32
    %c0_i32_1 = arith.constant 0 : i32
    return %c0_i32, %c0_i32_0 : i32, i32
  }
  func.func @transform_15(%arg0: i32) -> (i32, i32) {
    %c0_i32 = arith.constant 0 : i32
    %c0_i32_0 = arith.constant 0 : i32
    %c0_i32_1 = arith.constant 0 : i32
    return %c0_i32, %c0_i32_0 : i32, i32
  }
}

</mosaic_0001>

<llo_original>
// kernel: tile.24
$region0: #{tile.24}
  %s0 = inlined_call_operand.vmem [shape: f32[8,4,8], index: 0, kind: input, shape index: {}]
  %s1 = inlined_call_operand.vmem [shape: f32[8,32], index: 1, kind: output, shape index: {}]
  $region1: #{tile.24} parent=0
    #allocation0 [shape = 'u8[32768]{0}', space=vmem, size = 0x8000, scoped, tag = 'scoped mem for input reshape']
    %s3 = sshllo.u32 0, 4
    %s4 = smul.addr 4, 7
    %s5 = scalar_lea.vmem %s0, %s4
    %v6 = vld [vmem:[%s5] sm:%s3]
    %s7 = scalar_lea.vmem [#allocation0], 56
    %8 = vst [vmem:[%s7] sm:%s3] %v6
    %s9 = smul.addr 4, 6
    %s10 = scalar_lea.vmem %s0, %s9
    %v11 = vld [vmem:[%s10] sm:%s3]
    %s12 = scalar_lea.vmem [#allocation0], 48
    %13 = vst [vmem:[%s12] sm:%s3] %v11
    %s14 = smul.addr 4, 5
    %s15 = scalar_lea.vmem %s0, %s14
    %v16 = vld [vmem:[%s15] sm:%s3]
    %s17 = scalar_lea.vmem [#allocation0], 40
    %18 = vst [vmem:[%s17] sm:%s3] %v16
    %s19 = smul.addr 4, 4
    %s20 = scalar_lea.vmem %s0, %s19
    %v21 = vld [vmem:[%s20] sm:%s3]
    %s22 = scalar_lea.vmem [#allocation0], 32
    %23 = vst [vmem:[%s22] sm:%s3] %v21
    %s24 = smul.addr 4, 3
    %s25 = scalar_lea.vmem %s0, %s24
    %v26 = vld [vmem:[%s25] sm:%s3]
    %s27 = scalar_lea.vmem [#allocation0], 24
    %28 = vst [vmem:[%s27] sm:%s3] %v26
    %s29 = smul.addr 4, 2
    %s30 = scalar_lea.vmem %s0, %s29
    %v31 = vld [vmem:[%s30] sm:%s3]
    %s32 = scalar_lea.vmem [#allocation0], 16
    %33 = vst [vmem:[%s32] sm:%s3] %v31
    %s34 = scalar_lea.vmem %s0, 4
    %v35 = vld [vmem:[%s34] sm:%s3]
    %s36 = scalar_lea.vmem [#allocation0], 8
    %37 = vst [vmem:[%s36] sm:%s3] %v35
    %v38 = vld [vmem:[%s0] sm:%s3]
    %39 = vst [vmem:[#allocation0] sm:%s3] %v38
    %v40 = vld [vmem:[#allocation0] ss:$8 sm:$0xf]
    %v41 = vld [vmem:[#allocation0] ss:$8 sm:$0xf0]
    %vm42 = vcmask 1047556
    %v43 = vsel %vm42, %v41, %v40
    %vm44 = vcmask 64512
    %45 = vst.msk [vmem:[%s1] sm:$0xff] %vm44, %v43
    %s46 = scalar_lea.vmem [#allocation0], 3
    %v47 = vld [vmem:[%s46] ss:$8 sm:$0xf]
    %s48 = scalar_lea.vmem [#allocation0], 3
    %v49 = vld [vmem:[%s48] ss:$8 sm:$0xf0]
    %vm50 = vcmask 1047556
    %v51 = vsel %vm50, %v49, %v47
    %52 = vrot.lane.b32.xlu0 %v51, 24
    %v53 = vpop.permute.xlu0 %52
    %vm54 = vcmask 261312
    %55 = vst.msk [vmem:[%s1] sm:$0xff] %vm54, %v53
    %s56 = scalar_lea.vmem [#allocation0], 2
    %v57 = vld [vmem:[%s56] ss:$8 sm:$0xf]
    %s58 = scalar_lea.vmem [#allocation0], 2
    %v59 = vld [vmem:[%s58] ss:$8 sm:$0xf0]
    %vm60 = vcmask 1047556
    %v61 = vsel %vm60, %v59, %v57
    %62 = vrot.lane.b32.xlu0 %v61, 16
    %v63 = vpop.permute.xlu0 %62
    %vm64 = vcmask 195712
    %65 = vst.msk [vmem:[%s1] sm:$0xff] %vm64, %v63
    %s66 = scalar_lea.vmem [#allocation0], 1
    %v67 = vld [vmem:[%s66] ss:$8 sm:$0xf]
    %s68 = scalar_lea.vmem [#allocation0], 1
    %v69 = vld [vmem:[%s68] ss:$8 sm:$0xf0]
    %vm70 = vcmask 1047556
    %v71 = vsel %vm70, %v69, %v67
    %72 = vrot.lane.b32.xlu0 %v71, 8
    %v73 = vpop.permute.xlu0 %72
    %vm74 = vcmask 130112
    %75 = vst.msk [vmem:[%s1] sm:$0xff] %vm74, %v73

// kernel: tile.34
$region0: #{tile.34}
  %s0 = inlined_call_operand.vmem [shape: f32[8,2,8], index: 0, kind: input, shape index: {}]
  %s1 = inlined_call_operand.vmem [shape: f32[8,16], index: 1, kind: output, shape index: {}]
  $region1: #{tile.34} parent=0
    #allocation0 [shape = 'u8[32768]{0}', space=vmem, size = 0x8000, scoped, tag = 'scoped mem for input reshape']
    %s3 = sshllo.u32 0, 2
    %s4 = smul.addr 2, 7
    %s5 = scalar_lea.vmem %s0, %s4
    %v6 = vld [vmem:[%s5] sm:%s3]
    %s7 = scalar_lea.vmem [#allocation0], 56
    %8 = vst [vmem:[%s7] sm:%s3] %v6
    %s9 = smul.addr 2, 6
    %s10 = scalar_lea.vmem %s0, %s9
    %v11 = vld [vmem:[%s10] sm:%s3]
    %s12 = scalar_lea.vmem [#allocation0], 48
    %13 = vst [vmem:[%s12] sm:%s3] %v11
    %s14 = smul.addr 2, 5
    %s15 = scalar_lea.vmem %s0, %s14
    %v16 = vld [vmem:[%s15] sm:%s3]
    %s17 = scalar_lea.vmem [#allocation0], 40
    %18 = vst [vmem:[%s17] sm:%s3] %v16
    %s19 = smul.addr 2, 4
    %s20 = scalar_lea.vmem %s0, %s19
    %v21 = vld [vmem:[%s20] sm:%s3]
    %s22 = scalar_lea.vmem [#allocation0], 32
    %23 = vst [vmem:[%s22] sm:%s3] %v21
    %s24 = smul.addr 2, 3
    %s25 = scalar_lea.vmem %s0, %s24
    %v26 = vld [vmem:[%s25] sm:%s3]
    %s27 = scalar_lea.vmem [#allocation0], 24
    %28 = vst [vmem:[%s27] sm:%s3] %v26
    %s29 = smul.addr 2, 2
    %s30 = scalar_lea.vmem %s0, %s29
    %v31 = vld [vmem:[%s30] sm:%s3]
    %s32 = scalar_lea.vmem [#allocation0], 16
    %33 = vst [vmem:[%s32] sm:%s3] %v31
    %s34 = scalar_lea.vmem %s0, 2
    %v35 = vld [vmem:[%s34] sm:%s3]
    %s36 = scalar_lea.vmem [#allocation0], 8
    %37 = vst [vmem:[%s36] sm:%s3] %v35
    %v38 = vld [vmem:[%s0] sm:%s3]
    %39 = vst [vmem:[#allocation0] sm:%s3] %v38
    %v40 = vld [vmem:[#allocation0] ss:$8 sm:$0xf]
    %v41 = vld [vmem:[#allocation0] ss:$8 sm:$0xf0]
    %vm42 = vcmask 1047556
    %v43 = vsel %vm42, %v41, %v40
    %vm44 = vcmask 64512
    %45 = vst.msk [vmem:[%s1] sm:$0xff] %vm44, %v43
    %s46 = scalar_lea.vmem [#allocation0], 1
    %v47 = vld [vmem:[%s46] ss:$8 sm:$0xf]
    %s48 = scalar_lea.vmem [#allocation0], 1
    %v49 = vld [vmem:[%s48] ss:$8 sm:$0xf0]
    %vm50 = vcmask 1047556
    %v51 = vsel %vm50, %v49, %v47
    %52 = vrot.lane.b32.xlu0 %v51, 8
    %v53 = vpop.permute.xlu0 %52
    %vm54 = vcmask 130112
    %55 = vst.msk [vmem:[%s1] sm:$0xff] %vm54, %v53

// kernel: chatglm_model_forward.5
$region0: #{chatglm_model_forward.5}
  #allocation0 [shape = 'u32[]', space=smem, size = 0x4, offset = 0x4, fixed_abs, tag = 'smem constant byte address 0x4 - core index']
  #allocation1 [shape = 'u32[144,128]{1,0:T(1,128)}', space=vmem, size = 0x12000, scoped, tag = 'internal scratch']
  %s0 = inlined_call_operand.vmem [shape: f32[8,32], index: 0, kind: input, shape index: {}]
  %s1 = inlined_call_operand.vmem [shape: f32[1,32], index: 1, kind: input, shape index: {}]
  %s2 = inlined_call_operand.hbm [shape: f32[8,32], index: 2, kind: output, shape index: {}]
  %s3 = sld [smem:[#allocation0]]
  $region18: #{chatglm_model_forward.5} parent=0
    _
  %s5 = ssub.s32 1, %s3
  %s6 = scalar_select 0, %s5, %s3
  $region1: #{chatglm_model_forward.5} parent=0
    #allocation2 [shape = 'u8[4096]{0}', space=vmem, size = 0x1000, scoped, tag = 'output window, operand 0, single buffered']
    #allocation3 [shape = 's32[1]{0}', space=sflag, size = 0x4, scoped, tag = 'scoped memory for chatglm_model_forward.5']
    %7 = vsyncpa [#allocation3], 0
    // Predicated region
    $region2: #{chatglm_model_forward.5} parent=1 // pred_check
      _
    $region3: #{chatglm_model_forward.5} parent=1 // pred_check_branch
      %9 = sbr.rel (0) target = $region5
    $region4: #{chatglm_model_forward.5} parent=1 // pred_region
      _
    $region5: #{chatglm_model_forward.5} parent=1 // pred_fallthru
      _
    // Predicated region
    $region6: #{chatglm_model_forward.5} parent=1 // pred_check
      _
    $region7: #{chatglm_model_forward.5} parent=1 // pred_check_branch
      %11 = sbr.rel (0) target = $region9
    $region8: #{chatglm_model_forward.5} parent=1 // pred_region
      _
    $region9: #{chatglm_model_forward.5} parent=1 // pred_fallthru
      _
    %v12 = vld [vmem:[%s0] sm:$0xff]
    %v13 = vld [vmem:[%s1] sm:$0x1]
    %v14 = vmul.f32 %v12, %v12
    %vm15 = vcmask 261120
    %v16 = vsel %vm15, %v14, 0.0
    %17 = vadd.xlane.f32.xlu0 %v16
    %v18 = vpop.xlane.xlu0 %17
    %v19 = vrcp.pop 32.0
    %v20 = vmul.f32 %v18, %v19
    %v21 = vadd.f32 %v20, 1e-05
    %v22 = vrsqrt.pop %v21
    %v23 = vmul.f32 %v12, %v22
    %v25 = vlaneseq
    %v26 = vshrl.u32 %v25, 7
    %v27 = vsub.s32 0, %v26
    %v28 = vrot.slane %v13, %v27
    %v30 = vmul.f32 %v23, %v28
    %31 = vst.msk [vmem:[#allocation2] sm:$0xff] %vm15, %v30
    // Predicated region
    $region10: #{chatglm_model_forward.5} parent=1 // pred_check
      _
    $region11: #{chatglm_model_forward.5} parent=1 // pred_check_branch
      %33 = sbr.rel (0) target = $region13
    $region12: #{chatglm_model_forward.5} parent=1 // pred_region
      %s35 = ssub.s32 128, 128
      %36 = vsyncadd [#allocation3], %s35
      %s38 = sshll.u32 [#allocation2], 4
      %s39 = int_to_ptr.vmem [resolvable:$true] %s38
      %41 = dma.vmem_to_hbm [thread:$0]  %s39, 128, %s2, [#allocation3]
    $region13: #{chatglm_model_forward.5} parent=1 // pred_fallthru
      _
    // Predicated region
    $region14: #{chatglm_model_forward.5} parent=1 // pred_check
      _
    $region15: #{chatglm_model_forward.5} parent=1 // pred_check_branch
      %43 = sbr.rel (0) target = $region17
    $region16: #{chatglm_model_forward.5} parent=1 // pred_region
      %44 = dma.done [#allocation3], 128
    $region17: #{chatglm_model_forward.5} parent=1 // pred_fallthru
      _
    %45 = vsyncpa [#allocation3], 1

// kernel: chatglm_model_forward.3
$region0: #{chatglm_model_forward.3}
  #allocation0 [shape = 'u32[]', space=smem, size = 0x4, offset = 0x4, fixed_abs, tag = 'smem constant byte address 0x4 - core index']
  #allocation1 [shape = 'u32[144,128]{1,0:T(1,128)}', space=vmem, size = 0x12000, scoped, tag = 'internal scratch']
  %s0 = inlined_call_operand.vmem [shape: f32[8,32], index: 0, kind: input, shape index: {}]
  %s1 = inlined_call_operand.vmem [shape: f32[8,32], index: 1, kind: input, shape index: {}]
  %s2 = inlined_call_operand.vmem [shape: f32[8,32], index: 2, kind: input, shape index: {}]
  %s3 = inlined_call_operand.vmem [shape: f32[8,16], index: 3, kind: input, shape index: {}]
  %s4 = inlined_call_operand.vmem [shape: f32[8,16], index: 4, kind: input, shape index: {}]
  %s5 = inlined_call_operand.vmem [shape: f32[32,32], index: 5, kind: input, shape index: {}]
  %s6 = inlined_call_operand.vmem [shape: f32[16,16], index: 6, kind: input, shape index: {}]
  %s7 = inlined_call_operand.vmem [shape: f32[1,32], index: 7, kind: input, shape index: {}]
  %s8 = inlined_call_operand.vmem [shape: f32[1,32], index: 8, kind: input, shape index: {}]
  %s9 = inlined_call_operand.vmem [shape: f32[32,64], index: 9, kind: input, shape index: {}]
  %s10 = inlined_call_operand.vmem [shape: f32[1,64], index: 10, kind: input, shape index: {}]
  %s11 = inlined_call_operand.vmem [shape: f32[32,32], index: 11, kind: input, shape index: {}]
  %s12 = inlined_call_operand.vmem [shape: f32[32,64], index: 12, kind: input, shape index: {}]
  %s13 = inlined_call_operand.vmem [shape: f32[32,64], index: 13, kind: input, shape index: {}]
  %s14 = inlined_call_operand.vmem [shape: f32[64,32], index: 14, kind: input, shape index: {}]
  %s15 = inlined_call_operand.vmem [shape: f32[8,32], index: 15, kind: output, shape index: {}]
  %s16 = sld [smem:[#allocation0]]
  $region70: #{chatglm_model_forward.3} parent=0
    _
  %s18 = ssub.s32 1, %s16
  %s19 = scalar_select 0, %s18, %s16
  // Predicated region
  $region2: #{chatglm_model_forward.3} parent=0 // pred_check
    _
  $region3: #{chatglm_model_forward.3} parent=0 // pred_check_branch
    %21 = sbr.rel (0) target = $region5
  $region4: #{chatglm_model_forward.3} parent=0 // pred_region
    _
  $region5: #{chatglm_model_forward.3} parent=0 // pred_fallthru
    _
  // Predicated region
  $region6: #{chatglm_model_forward.3} parent=0 // pred_check
    _
  $region7: #{chatglm_model_forward.3} parent=0 // pred_check_branch
    %23 = sbr.rel (0) target = $region9
  $region8: #{chatglm_model_forward.3} parent=0 // pred_region
    _
  $region9: #{chatglm_model_forward.3} parent=0 // pred_fallthru
    _
  // Predicated region
  $region10: #{chatglm_model_forward.3} parent=0 // pred_check
    _
  $region11: #{chatglm_model_forward.3} parent=0 // pred_check_branch
    %25 = sbr.rel (0) target = $region13
  $region12: #{chatglm_model_forward.3} parent=0 // pred_region
    _
  $region13: #{chatglm_model_forward.3} parent=0 // pred_fallthru
    _
  // Predicated region
  $region14: #{chatglm_model_forward.3} parent=0 // pred_check
    _
  $region15: #{chatglm_model_forward.3} parent=0 // pred_check_branch
    %27 = sbr.rel (0) target = $region17
  $region16: #{chatglm_model_forward.3} parent=0 // pred_region
    _
  $region17: #{chatglm_model_forward.3} parent=0 // pred_fallthru
    _
  // Predicated region
  $region18: #{chatglm_model_forward.3} parent=0 // pred_check
    _
  $region19: #{chatglm_model_forward.3} parent=0 // pred_check_branch
    %29 = sbr.rel (0) target = $region21
  $region20: #{chatglm_model_forward.3} parent=0 // pred_region
    _
  $region21: #{chatglm_model_forward.3} parent=0 // pred_fallthru
    _
  // Predicated region
  $region22: #{chatglm_model_forward.3} parent=0 // pred_check
    _
  $region23: #{chatglm_model_forward.3} parent=0 // pred_check_branch
    %31 = sbr.rel (0) target = $region25
  $region24: #{chatglm_model_forward.3} parent=0 // pred_region
    _
  $region25: #{chatglm_model_forward.3} parent=0 // pred_fallthru
    _
  // Predicated region
  $region26: #{chatglm_model_forward.3} parent=0 // pred_check
    _
  $region27: #{chatglm_model_forward.3} parent=0 // pred_check_branch
    %33 = sbr.rel (0) target = $region29
  $region28: #{chatglm_model_forward.3} parent=0 // pred_region
    _
  $region29: #{chatglm_model_forward.3} parent=0 // pred_fallthru
    _
  // Predicated region
  $region30: #{chatglm_model_forward.3} parent=0 // pred_check
    _
  $region31: #{chatglm_model_forward.3} parent=0 // pred_check_branch
    %35 = sbr.rel (0) target = $region33
  $region32: #{chatglm_model_forward.3} parent=0 // pred_region
    _
  $region33: #{chatglm_model_forward.3} parent=0 // pred_fallthru
    _
  // Predicated region
  $region34: #{chatglm_model_forward.3} parent=0 // pred_check
    _
  $region35: #{chatglm_model_forward.3} parent=0 // pred_check_branch
    %37 = sbr.rel (0) target = $region37
  $region36: #{chatglm_model_forward.3} parent=0 // pred_region
    _
  $region37: #{chatglm_model_forward.3} parent=0 // pred_fallthru
    _
  // Predicated region
  $region38: #{chatglm_model_forward.3} parent=0 // pred_check
    _
  $region39: #{chatglm_model_forward.3} parent=0 // pred_check_branch
    %39 = sbr.rel (0) target = $region41
  $region40: #{chatglm_model_forward.3} parent=0 // pred_region
    _
  $region41: #{chatglm_model_forward.3} parent=0 // pred_fallthru
    _
  // Predicated region
  $region42: #{chatglm_model_forward.3} parent=0 // pred_check
    _
  $region43: #{chatglm_model_forward.3} parent=0 // pred_check_branch
    %41 = sbr.rel (0) target = $region45
  $region44: #{chatglm_model_forward.3} parent=0 // pred_region
    _
  $region45: #{chatglm_model_forward.3} parent=0 // pred_fallthru
    _
  // Predicated region
  $region46: #{chatglm_model_forward.3} parent=0 // pred_check
    _
  $region47: #{chatglm_model_forward.3} parent=0 // pred_check_branch
    %43 = sbr.rel (0) target = $region49
  $region48: #{chatglm_model_forward.3} parent=0 // pred_region
    _
  $region49: #{chatglm_model_forward.3} parent=0 // pred_fallthru
    _
  // Predicated region
  $region50: #{chatglm_model_forward.3} parent=0 // pred_check
    _
  $region51: #{chatglm_model_forward.3} parent=0 // pred_check_branch
    %45 = sbr.rel (0) target = $region53
  $region52: #{chatglm_model_forward.3} parent=0 // pred_region
    _
  $region53: #{chatglm_model_forward.3} parent=0 // pred_fallthru
    _
  // Predicated region
  $region54: #{chatglm_model_forward.3} parent=0 // pred_check
    _
  $region55: #{chatglm_model_forward.3} parent=0 // pred_check_branch
    %47 = sbr.rel (0) target = $region57
  $region56: #{chatglm_model_forward.3} parent=0 // pred_region
    _
  $region57: #{chatglm_model_forward.3} parent=0 // pred_fallthru
    _
  // Predicated region
  $region58: #{chatglm_model_forward.3} parent=0 // pred_check
    _
  $region59: #{chatglm_model_forward.3} parent=0 // pred_check_branch
    %49 = sbr.rel (0) target = $region61
  $region60: #{chatglm_model_forward.3} parent=0 // pred_region
    _
  $region61: #{chatglm_model_forward.3} parent=0 // pred_fallthru
    _
  %v50 = vld [vmem:[%s0] sm:$0xff]
  %v51 = vld [vmem:[%s7] sm:$0x1]
  %v52 = vmul.f32 %v50, %v50
  %vm53 = vcmask 261120
  %v54 = vsel %vm53, %v52, 0.0
  %55 = vadd.xlane.f32.xlu0 %v54
  %v56 = vpop.xlane.xlu0 %55
  %v57 = vrcp.pop 32.0
  %v58 = vmul.f32 %v56, %v57
  %v59 = vadd.f32 %v58, 1e-05
  %v60 = vrsqrt.pop %v59
  %v61 = vmul.f32 %v50, %v60
  %v63 = vlaneseq
  %v64 = vshrl.u32 %v63, 7
  %v65 = vsub.s32 0, %v64
  %v66 = vrot.slane %v51, %v65
  %v68 = vmul.f32 %v61, %v66
  %v69 = vld [vmem:[%s9] sm:$0xff]
  %v70 = vld [vmem:[%s9 + $0x8] sm:$0xff]
  %v71 = vld [vmem:[%s9 + $0x10] sm:$0xff]
  %v72 = vld [vmem:[%s9 + $0x18] sm:$0xff]
  %v73 = vld [vmem:[%s10] sm:$0x1]
  %v75 = vlaneseq
  %v76 = vshrl.u32 %v75, 7
  %v77 = vsub.s32 0, %v76
  %v78 = vrot.slane %v73, %v77
  %v81 = vsel %vm53, %v68, 0
  %83 = vmatprep.subr.mxu0 0.0
  %84 = vmatpush1.msra.mxu0 %v69
  %85 = vmatprep.subr.mxu0 0.0
  %86 = vmatpush1.msra.mxu0 %v70
  %87 = vmatprep.subr.mxu0 0.0
  %88 = vmatpush1.msra.mxu0 %v71
  %89 = vmatprep.subr.mxu0 0.0
  %90 = vmatpush1.msra.mxu0 %v72
  %91 = vmatprep.subr.mxu0 0.0
  %92 = vmatpush1.msra.mxu0 0.0
  %93 = vmatprep.subr.mxu0 0.0
  %94 = vmatpush1.msra.mxu0 0.0
  %95 = vmatprep.subr.mxu0 0.0
  %96 = vmatpush1.msra.mxu0 0.0
  %97 = vmatprep.subr.mxu0 0.0
  %98 = vmatpush1.msra.mxu0 0.0
  %99 = vmatprep.subr.mxu0 0.0
  %100 = vmatpush1.msra.mxu0 0.0
  %101 = vmatprep.subr.mxu0 0.0
  %102 = vmatpush1.msra.mxu0 0.0
  %103 = vmatprep.subr.mxu0 0.0
  %104 = vmatpush1.msra.mxu0 0.0
  %105 = vmatprep.subr.mxu0 0.0
  %106 = vmatpush1.msra.mxu0 0.0
  %107 = vmatprep.subr.mxu0 0.0
  %108 = vmatpush1.msra.mxu0 0.0
  %109 = vmatprep.subr.mxu0 0.0
  %110 = vmatpush1.msra.mxu0 0.0
  %111 = vmatprep.subr.mxu0 0.0
  %112 = vmatpush1.msra.mxu0 0.0
  %113 = vmatprep.subr.mxu0 0.0
  %114 = vmatpush1.msra.mxu0 0.0
  %115 = vmatprep.subr.mxu0 0.0
  %116 = vmatpush1.msra.mxu0 0.0
  %117 = vmatprep.subr.mxu0 0.0
  %118 = vmatpush1.msra.mxu0 0.0
  %119 = vmatprep.subr.mxu0 0.0
  %120 = vmatpush1.msra.mxu0 0.0
  %121 = vmatprep.subr.mxu0 0.0
  %122 = vmatpush1.msra.mxu0 0.0
  %123 = vmatprep.subr.mxu0 0.0
  %124 = vmatpush1.msra.mxu0 0.0
  %125 = vmatprep.subr.mxu0 0.0
  %126 = vmatpush1.msra.mxu0 0.0
  %127 = vmatprep.subr.mxu0 0.0
  %128 = vmatpush1.msra.mxu0 0.0
  %129 = vmatprep.subr.mxu0 0.0
  %130 = vmatpush1.msra.mxu0 0.0
  %131 = vmatprep.subr.mxu0 0.0
  %132 = vmatpush1.msra.mxu0 0.0
  %133 = vmatprep.subr.mxu0 0.0
  %134 = vmatpush1.msra.mxu0 0.0
  %135 = vmatprep.subr.mxu0 0.0
  %136 = vmatpush1.msra.mxu0 0.0
  %137 = vmatprep.subr.mxu0 0.0
  %138 = vmatpush1.msra.mxu0 0.0
  %139 = vmatprep.subr.mxu0 0.0
  %140 = vmatpush1.msra.mxu0 0.0
  %141 = vmatprep.subr.mxu0 0.0
  %142 = vmatpush1.msra.mxu0 0.0
  %143 = vmatprep.subr.mxu0 0.0
  %144 = vmatpush1.msra.mxu0 0.0
  %145 = vmatprep.subr.mxu0 0.0
  %146 = vmatpush1.msra.mxu0 0.0
  %147 = vmatprep.mubr.f32.mxu0 0.0
  %148 = vmatmul.mubr.f32.gmra.mrb[0].mxu0 %v81
  %v149 = vpop.f32.mrb[0].mxu0
  %v150 = vadd.f32 %v78, %v149
  %v151 = vpop.f32.mrb[0].mxu0
  %152 = vdwg.mxu0
  %v153 = vld [vmem:[%s1] sm:$0xff]
  %v154 = vmul.f32 %v150, %v153
  %v155 = vld [vmem:[%s5] sm:$0xff]
  %v156 = vld [vmem:[%s5 + $0x8] sm:$0xff]
  %v157 = vld [vmem:[%s5 + $0x10] sm:$0xff]
  %v158 = vld [vmem:[%s5 + $0x18] sm:$0xff]
  %v160 = vsel %vm53, %v150, 0
  %162 = vmatprep.subr.mxu0 0.0
  %163 = vmatpush1.msra.mxu0 %v155
  %164 = vmatprep.subr.mxu0 0.0
  %165 = vmatpush1.msra.mxu0 %v156
  %166 = vmatprep.subr.mxu0 0.0
  %167 = vmatpush1.msra.mxu0 %v157
  %168 = vmatprep.subr.mxu0 0.0
  %169 = vmatpush1.msra.mxu0 %v158
  %170 = vmatprep.subr.mxu0 0.0
  %171 = vmatpush1.msra.mxu0 0.0
  %172 = vmatprep.subr.mxu0 0.0
  %173 = vmatpush1.msra.mxu0 0.0
  %174 = vmatprep.subr.mxu0 0.0
  %175 = vmatpush1.msra.mxu0 0.0
  %176 = vmatprep.subr.mxu0 0.0
  %177 = vmatpush1.msra.mxu0 0.0
  %178 = vmatprep.subr.mxu0 0.0
  %179 = vmatpush1.msra.mxu0 0.0
  %180 = vmatprep.subr.mxu0 0.0
  %181 = vmatpush1.msra.mxu0 0.0
  %182 = vmatprep.subr.mxu0 0.0
  %183 = vmatpush1.msra.mxu0 0.0
  %184 = vmatprep.subr.mxu0 0.0
  %185 = vmatpush1.msra.mxu0 0.0
  %186 = vmatprep.subr.mxu0 0.0
  %187 = vmatpush1.msra.mxu0 0.0
  %188 = vmatprep.subr.mxu0 0.0
  %189 = vmatpush1.msra.mxu0 0.0
  %190 = vmatprep.subr.mxu0 0.0
  %191 = vmatpush1.msra.mxu0 0.0
  %192 = vmatprep.subr.mxu0 0.0
  %193 = vmatpush1.msra.mxu0 0.0
  %194 = vmatprep.subr.mxu0 0.0
  %195 = vmatpush1.msra.mxu0 0.0
  %196 = vmatprep.subr.mxu0 0.0
  %197 = vmatpush1.msra.mxu0 0.0
  %198 = vmatprep.subr.mxu0 0.0
  %199 = vmatpush1.msra.mxu0 0.0
  %200 = vmatprep.subr.mxu0 0.0
  %201 = vmatpush1.msra.mxu0 0.0
  %202 = vmatprep.subr.mxu0 0.0
  %203 = vmatpush1.msra.mxu0 0.0
  %204 = vmatprep.subr.mxu0 0.0
  %205 = vmatpush1.msra.mxu0 0.0
  %206 = vmatprep.subr.mxu0 0.0
  %207 = vmatpush1.msra.mxu0 0.0
  %208 = vmatprep.subr.mxu0 0.0
  %209 = vmatpush1.msra.mxu0 0.0
  %210 = vmatprep.subr.mxu0 0.0
  %211 = vmatpush1.msra.mxu0 0.0
  %212 = vmatprep.subr.mxu0 0.0
  %213 = vmatpush1.msra.mxu0 0.0
  %214 = vmatprep.subr.mxu0 0.0
  %215 = vmatpush1.msra.mxu0 0.0
  %216 = vmatprep.subr.mxu0 0.0
  %217 = vmatpush1.msra.mxu0 0.0
  %218 = vmatprep.subr.mxu0 0.0
  %219 = vmatpush1.msra.mxu0 0.0
  %220 = vmatprep.subr.mxu0 0.0
  %221 = vmatpush1.msra.mxu0 0.0
  %222 = vmatprep.subr.mxu0 0.0
  %223 = vmatpush1.msra.mxu0 0.0
  %224 = vmatprep.subr.mxu0 0.0
  %225 = vmatpush1.msra.mxu0 0.0
  %226 = vmatprep.mubr.f32.mxu0 0.0
  %227 = vmatmul.mubr.f32.gmra.mrb[0].mxu0 %v160
  %v228 = vpop.f32.mrb[0].mxu0
  %v229 = vadd.f32 0.0, %v228
  %v230 = vpop.f32.mrb[0].mxu0
  %231 = vdwg.mxu0
  %v232 = vld [vmem:[%s2] sm:$0xff]
  %v233 = vmul.f32 %v229, %v232
  %v234 = vadd.f32 %v154, %v233
  %v235 = vld [vmem:[%s3] sm:$0xff]
  %237 = vrot.lane.b32.xlu0 %v235, 32
  %v238 = vpop.permute.xlu0 %237
  %v240 = vmul.f32 %v150, %v238
  %v241 = vld [vmem:[%s6] sm:$0xff]
  %v242 = vld [vmem:[%s6 + $0x8] sm:$0xff]
  %243 = vrot.lane.b32.xlu0 %v150, 96
  %v244 = vpop.permute.xlu0 %243
  %vm245 = vcmask 130048
  %v246 = vsel %vm245, %v244, 0
  %248 = vmatprep.subr.mxu0 0.0
  %249 = vmatpush1.msra.mxu0 %v241
  %250 = vmatprep.subr.mxu0 0.0
  %251 = vmatpush1.msra.mxu0 %v242
  %252 = vmatprep.subr.mxu0 0.0
  %253 = vmatpush1.msra.mxu0 0.0
  %254 = vmatprep.subr.mxu0 0.0
  %255 = vmatpush1.msra.mxu0 0.0
  %256 = vmatprep.subr.mxu0 0.0
  %257 = vmatpush1.msra.mxu0 0.0
  %258 = vmatprep.subr.mxu0 0.0
  %259 = vmatpush1.msra.mxu0 0.0
  %260 = vmatprep.subr.mxu0 0.0
  %261 = vmatpush1.msra.mxu0 0.0
  %262 = vmatprep.subr.mxu0 0.0
  %263 = vmatpush1.msra.mxu0 0.0
  %264 = vmatprep.subr.mxu0 0.0
  %265 = vmatpush1.msra.mxu0 0.0
  %266 = vmatprep.subr.mxu0 0.0
  %267 = vmatpush1.msra.mxu0 0.0
  %268 = vmatprep.subr.mxu0 0.0
  %269 = vmatpush1.msra.mxu0 0.0
  %270 = vmatprep.subr.mxu0 0.0
  %271 = vmatpush1.msra.mxu0 0.0
  %272 = vmatprep.subr.mxu0 0.0
  %273 = vmatpush1.msra.mxu0 0.0
  %274 = vmatprep.subr.mxu0 0.0
  %275 = vmatpush1.msra.mxu0 0.0
  %276 = vmatprep.subr.mxu0 0.0
  %277 = vmatpush1.msra.mxu0 0.0
  %278 = vmatprep.subr.mxu0 0.0
  %279 = vmatpush1.msra.mxu0 0.0
  %280 = vmatprep.subr.mxu0 0.0
  %281 = vmatpush1.msra.mxu0 0.0
  %282 = vmatprep.subr.mxu0 0.0
  %283 = vmatpush1.msra.mxu0 0.0
  %284 = vmatprep.subr.mxu0 0.0
  %285 = vmatpush1.msra.mxu0 0.0
  %286 = vmatprep.subr.mxu0 0.0
  %287 = vmatpush1.msra.mxu0 0.0
  %288 = vmatprep.subr.mxu0 0.0
  %289 = vmatpush1.msra.mxu0 0.0
  %290 = vmatprep.subr.mxu0 0.0
  %291 = vmatpush1.msra.mxu0 0.0
  %292 = vmatprep.subr.mxu0 0.0
  %293 = vmatpush1.msra.mxu0 0.0
  %294 = vmatprep.subr.mxu0 0.0
  %295 = vmatpush1.msra.mxu0 0.0
  %296 = vmatprep.subr.mxu0 0.0
  %297 = vmatpush1.msra.mxu0 0.0
  %298 = vmatprep.subr.mxu0 0.0
  %299 = vmatpush1.msra.mxu0 0.0
  %300 = vmatprep.subr.mxu0 0.0
  %301 = vmatpush1.msra.mxu0 0.0
  %302 = vmatprep.subr.mxu0 0.0
  %303 = vmatpush1.msra.mxu0 0.0
  %304 = vmatprep.subr.mxu0 0.0
  %305 = vmatpush1.msra.mxu0 0.0
  %306 = vmatprep.subr.mxu0 0.0
  %307 = vmatpush1.msra.mxu0 0.0
  %308 = vmatprep.subr.mxu0 0.0
  %309 = vmatpush1.msra.mxu0 0.0
  %310 = vmatprep.subr.mxu0 0.0
  %311 = vmatpush1.msra.mxu0 0.0
  %312 = vmatprep.mubr.f32.mxu0 0.0
  %313 = vmatmul.mubr.f32.gmra.mrb[0].mxu0 %v246
  %v314 = vpop.f32.mrb[0].mxu0
  %v315 = vadd.f32 0.0, %v314
  %v316 = vpop.f32.mrb[0].mxu0
  %317 = vdwg.mxu0
  %v318 = vld [vmem:[%s4] sm:$0xff]
  %v319 = vmul.f32 %v315, %v318
  %321 = vrot.lane.b32.xlu0 %v319, 32
  %v322 = vpop.permute.xlu0 %321
  %v324 = vadd.f32 %v240, %v322
  %v325 = vmul.f32 %v234, 0.35355338
  %v326 = vlaneseq
  %v327 = vshrl.u32 %v326, 7
  %v328 = vlaneseq
  %v329 = vand.u32 %v328, 127
  %vm330 = vcmp.le.s32.totalorder %v329, %v327
  %332 = vrot.lane.b32.xlu0 %v324, 96
  %v333 = vpop.permute.xlu0 %332
  %vm334 = vcmask 64512
  %v336 = vsel %vm334, %v325, 0
  %v338 = vsel %vm334, %v333, 0
  %340 = vmatprep.subr.mxu0 0.0
  %341 = vmatpush1.xpose.msra.mxu0 %v338
  %342 = vmatprep.subr.mxu0 0.0
  %343 = vmatpush1.xpose.msra.mxu0 0.0
  %344 = vmatprep.subr.mxu0 0.0
  %345 = vmatpush1.xpose.msra.mxu0 0.0
  %346 = vmatprep.subr.mxu0 0.0
  %347 = vmatpush1.xpose.msra.mxu0 0.0
  %348 = vmatprep.subr.mxu0 0.0
  %349 = vmatpush1.xpose.msra.mxu0 0.0
  %350 = vmatprep.subr.mxu0 0.0
  %351 = vmatpush1.xpose.msra.mxu0 0.0
  %352 = vmatprep.subr.mxu0 0.0
  %353 = vmatpush1.xpose.msra.mxu0 0.0
  %354 = vmatprep.subr.mxu0 0.0
  %355 = vmatpush1.xpose.msra.mxu0 0.0
  %356 = vmatprep.subr.mxu0 0.0
  %357 = vmatpush1.xpose.msra.mxu0 0.0
  %358 = vmatprep.subr.mxu0 0.0
  %359 = vmatpush1.xpose.msra.mxu0 0.0
  %360 = vmatprep.subr.mxu0 0.0
  %361 = vmatpush1.xpose.msra.mxu0 0.0
  %362 = vmatprep.subr.mxu0 0.0
  %363 = vmatpush1.xpose.msra.mxu0 0.0
  %364 = vmatprep.subr.mxu0 0.0
  %365 = vmatpush1.xpose.msra.mxu0 0.0
  %366 = vmatprep.subr.mxu0 0.0
  %367 = vmatpush1.xpose.msra.mxu0 0.0
  %368 = vmatprep.subr.mxu0 0.0
  %369 = vmatpush1.xpose.msra.mxu0 0.0
  %370 = vmatprep.subr.mxu0 0.0
  %371 = vmatpush1.xpose.msra.mxu0 0.0
  %372 = vmatprep.subr.mxu0 0.0
  %373 = vmatpush1.xpose.msra.mxu0 0.0
  %374 = vmatprep.subr.mxu0 0.0
  %375 = vmatpush1.xpose.msra.mxu0 0.0
  %376 = vmatprep.subr.mxu0 0.0
  %377 = vmatpush1.xpose.msra.mxu0 0.0
  %378 = vmatprep.subr.mxu0 0.0
  %379 = vmatpush1.xpose.msra.mxu0 0.0
  %380 = vmatprep.subr.mxu0 0.0
  %381 = vmatpush1.xpose.msra.mxu0 0.0
  %382 = vmatprep.subr.mxu0 0.0
  %383 = vmatpush1.xpose.msra.mxu0 0.0
  %384 = vmatprep.subr.mxu0 0.0
  %385 = vmatpush1.xpose.msra.mxu0 0.0
  %386 = vmatprep.subr.mxu0 0.0
  %387 = vmatpush1.xpose.msra.mxu0 0.0
  %388 = vmatprep.subr.mxu0 0.0
  %389 = vmatpush1.xpose.msra.mxu0 0.0
  %390 = vmatprep.subr.mxu0 0.0
  %391 = vmatpush1.xpose.msra.mxu0 0.0
  %392 = vmatprep.subr.mxu0 0.0
  %393 = vmatpush1.xpose.msra.mxu0 0.0
  %394 = vmatprep.subr.mxu0 0.0
  %395 = vmatpush1.xpose.msra.mxu0 0.0
  %396 = vmatprep.subr.mxu0 0.0
  %397 = vmatpush1.xpose.msra.mxu0 0.0
  %398 = vmatprep.subr.mxu0 0.0
  %399 = vmatpush1.xpose.msra.mxu0 0.0
  %400 = vmatprep.subr.mxu0 0.0
  %401 = vmatpush1.xpose.msra.mxu0 0.0
  %402 = vmatprep.subr.mxu0 0.0
  %403 = vmatpush1.xpose.msra.mxu0 0.0
  %404 = vmatprep.mubr.f32.mxu0 0.0
  %405 = vmatmul.mubr.f32.gmra.mrb[0].mxu0 %v336
  %v406 = vpop.f32.mrb[0].mxu0
  %v407 = vadd.f32 0.0, %v406
  %v408 = vpop.f32.mrb[0].mxu0
  %409 = vdwg.mxu0
  %v410 = vsel %vm330, %v407, -1e+30
  %v411 = vsel %vm334, %v410, -inf
  %412 = vmax.xlane.f32.xlu0 %v411
  %v413 = vpop.xlane.xlu0 %412
  %v414 = vsub.f32 %v410, %v413
  %v415 = vmul.f32 %v414, 1.442695
  %v416 = vpow.pop %v415
  %v417 = vsel %vm334, %v416, 0.0
  %418 = vadd.xlane.f32.xlu0 %v417
  %v419 = vpop.xlane.xlu0 %418
  %v420 = vrcp.pop %v419
  %v421 = vmul.f32 %v416, %v420
  %422 = vrot.lane.b32.xlu0 %v150, 80
  %v423 = vpop.permute.xlu0 %422
  %v426 = vsel %vm334, %v421, 0
  %428 = vmatprep.subr.mxu0 0.0
  %429 = vmatpush1.msra.mxu0 %v423
  %430 = vmatprep.subr.mxu0 0.0
  %431 = vmatpush1.msra.mxu0 0.0
  %432 = vmatprep.subr.mxu0 0.0
  %433 = vmatpush1.msra.mxu0 0.0
  %434 = vmatprep.subr.mxu0 0.0
  %435 = vmatpush1.msra.mxu0 0.0
  %436 = vmatprep.subr.mxu0 0.0
  %437 = vmatpush1.msra.mxu0 0.0
  %438 = vmatprep.subr.mxu0 0.0
  %439 = vmatpush1.msra.mxu0 0.0
  %440 = vmatprep.subr.mxu0 0.0
  %441 = vmatpush1.msra.mxu0 0.0
  %442 = vmatprep.subr.mxu0 0.0
  %443 = vmatpush1.msra.mxu0 0.0
  %444 = vmatprep.subr.mxu0 0.0
  %445 = vmatpush1.msra.mxu0 0.0
  %446 = vmatprep.subr.mxu0 0.0
  %447 = vmatpush1.msra.mxu0 0.0
  %448 = vmatprep.subr.mxu0 0.0
  %449 = vmatpush1.msra.mxu0 0.0
  %450 = vmatprep.subr.mxu0 0.0
  %451 = vmatpush1.msra.mxu0 0.0
  %452 = vmatprep.subr.mxu0 0.0
  %453 = vmatpush1.msra.mxu0 0.0
  %454 = vmatprep.subr.mxu0 0.0
  %455 = vmatpush1.msra.mxu0 0.0
  %456 = vmatprep.subr.mxu0 0.0
  %457 = vmatpush1.msra.mxu0 0.0
  %458 = vmatprep.subr.mxu0 0.0
  %459 = vmatpush1.msra.mxu0 0.0
  %460 = vmatprep.subr.mxu0 0.0
  %461 = vmatpush1.msra.mxu0 0.0
  %462 = vmatprep.subr.mxu0 0.0
  %463 = vmatpush1.msra.mxu0 0.0
  %464 = vmatprep.subr.mxu0 0.0
  %465 = vmatpush1.msra.mxu0 0.0
  %466 = vmatprep.subr.mxu0 0.0
  %467 = vmatpush1.msra.mxu0 0.0
  %468 = vmatprep.subr.mxu0 0.0
  %469 = vmatpush1.msra.mxu0 0.0
  %470 = vmatprep.subr.mxu0 0.0
  %471 = vmatpush1.msra.mxu0 0.0
  %472 = vmatprep.subr.mxu0 0.0
  %473 = vmatpush1.msra.mxu0 0.0
  %474 = vmatprep.subr.mxu0 0.0
  %475 = vmatpush1.msra.mxu0 0.0
  %476 = vmatprep.subr.mxu0 0.0
  %477 = vmatpush1.msra.mxu0 0.0
  %478 = vmatprep.subr.mxu0 0.0
  %479 = vmatpush1.msra.mxu0 0.0
  %480 = vmatprep.subr.mxu0 0.0
  %481 = vmatpush1.msra.mxu0 0.0
  %482 = vmatprep.subr.mxu0 0.0
  %483 = vmatpush1.msra.mxu0 0.0
  %484 = vmatprep.subr.mxu0 0.0
  %485 = vmatpush1.msra.mxu0 0.0
  %486 = vmatprep.subr.mxu0 0.0
  %487 = vmatpush1.msra.mxu0 0.0
  %488 = vmatprep.subr.mxu0 0.0
  %489 = vmatpush1.msra.mxu0 0.0
  %490 = vmatprep.subr.mxu0 0.0
  %491 = vmatpush1.msra.mxu0 0.0
  %492 = vmatprep.mubr.f32.mxu0 0.0
  %493 = vmatmul.mubr.f32.gmra.mrb[0].mxu0 %v426
  %v494 = vpop.f32.mrb[0].mxu0
  %v495 = vadd.f32 0.0, %v494
  %v496 = vpop.f32.mrb[0].mxu0
  %497 = vdwg.mxu0
  %v498 = vld [vmem:[%s11] sm:$0xff]
  %499 = vrot.lane.b32.xlu0 %v325, 120
  %v500 = vpop.permute.xlu0 %499
  %v501 = vsel %vm334, %v500, 0
  %503 = vmatprep.subr.mxu0 0.0
  %504 = vmatpush1.xpose.msra.mxu0 %v338
  %505 = vmatprep.subr.mxu0 0.0
  %506 = vmatpush1.xpose.msra.mxu0 0.0
  %507 = vmatprep.subr.mxu0 0.0
  %508 = vmatpush1.xpose.msra.mxu0 0.0
  %509 = vmatprep.subr.mxu0 0.0
  %510 = vmatpush1.xpose.msra.mxu0 0.0
  %511 = vmatprep.subr.mxu0 0.0
  %512 = vmatpush1.xpose.msra.mxu0 0.0
  %513 = vmatprep.subr.mxu0 0.0
  %514 = vmatpush1.xpose.msra.mxu0 0.0
  %515 = vmatprep.subr.mxu0 0.0
  %516 = vmatpush1.xpose.msra.mxu0 0.0
  %517 = vmatprep.subr.mxu0 0.0
  %518 = vmatpush1.xpose.msra.mxu0 0.0
  %519 = vmatprep.subr.mxu0 0.0
  %520 = vmatpush1.xpose.msra.mxu0 0.0
  %521 = vmatprep.subr.mxu0 0.0
  %522 = vmatpush1.xpose.msra.mxu0 0.0
  %523 = vmatprep.subr.mxu0 0.0
  %524 = vmatpush1.xpose.msra.mxu0 0.0
  %525 = vmatprep.subr.mxu0 0.0
  %526 = vmatpush1.xpose.msra.mxu0 0.0
  %527 = vmatprep.subr.mxu0 0.0
  %528 = vmatpush1.xpose.msra.mxu0 0.0
  %529 = vmatprep.subr.mxu0 0.0
  %530 = vmatpush1.xpose.msra.mxu0 0.0
  %531 = vmatprep.subr.mxu0 0.0
  %532 = vmatpush1.xpose.msra.mxu0 0.0
  %533 = vmatprep.subr.mxu0 0.0
  %534 = vmatpush1.xpose.msra.mxu0 0.0
  %535 = vmatprep.subr.mxu0 0.0
  %536 = vmatpush1.xpose.msra.mxu0 0.0
  %537 = vmatprep.subr.mxu0 0.0
  %538 = vmatpush1.xpose.msra.mxu0 0.0
  %539 = vmatprep.subr.mxu0 0.0
  %540 = vmatpush1.xpose.msra.mxu0 0.0
  %541 = vmatprep.subr.mxu0 0.0
  %542 = vmatpush1.xpose.msra.mxu0 0.0
  %543 = vmatprep.subr.mxu0 0.0
  %544 = vmatpush1.xpose.msra.mxu0 0.0
  %545 = vmatprep.subr.mxu0 0.0
  %546 = vmatpush1.xpose.msra.mxu0 0.0
  %547 = vmatprep.subr.mxu0 0.0
  %548 = vmatpush1.xpose.msra.mxu0 0.0
  %549 = vmatprep.subr.mxu0 0.0
  %550 = vmatpush1.xpose.msra.mxu0 0.0
  %551 = vmatprep.subr.mxu0 0.0
  %552 = vmatpush1.xpose.msra.mxu0 0.0
  %553 = vmatprep.subr.mxu0 0.0
  %554 = vmatpush1.xpose.msra.mxu0 0.0
  %555 = vmatprep.subr.mxu0 0.0
  %556 = vmatpush1.xpose.msra.mxu0 0.0
  %557 = vmatprep.subr.mxu0 0.0
  %558 = vmatpush1.xpose.msra.mxu0 0.0
  %559 = vmatprep.subr.mxu0 0.0
  %560 = vmatpush1.xpose.msra.mxu0 0.0
  %561 = vmatprep.subr.mxu0 0.0
  %562 = vmatpush1.xpose.msra.mxu0 0.0
  %563 = vmatprep.subr.mxu0 0.0
  %564 = vmatpush1.xpose.msra.mxu0 0.0
  %565 = vmatprep.subr.mxu0 0.0
  %566 = vmatpush1.xpose.msra.mxu0 0.0
  %567 = vmatprep.mubr.f32.mxu0 0.0
  %568 = vmatmul.mubr.f32.gmra.mrb[0].mxu0 %v501
  %v569 = vpop.f32.mrb[0].mxu0
  %v570 = vadd.f32 0.0, %v569
  %v571 = vpop.f32.mrb[0].mxu0
  %572 = vdwg.mxu0
  %v573 = vsel %vm330, %v570, -1e+30
  %v574 = vsel %vm334, %v573, -inf
  %575 = vmax.xlane.f32.xlu0 %v574
  %v576 = vpop.xlane.xlu0 %575
  %v577 = vsub.f32 %v573, %v576
  %v578 = vmul.f32 %v577, 1.442695
  %v579 = vpow.pop %v578
  %v580 = vsel %vm334, %v579, 0.0
  %581 = vadd.xlane.f32.xlu0 %v580
  %v582 = vpop.xlane.xlu0 %581
  %v583 = vrcp.pop %v582
  %v584 = vmul.f32 %v579, %v583
  %v586 = vsel %vm334, %v584, 0
  %588 = vmatprep.subr.mxu0 0.0
  %589 = vmatpush1.msra.mxu0 %v423
  %590 = vmatprep.subr.mxu0 0.0
  %591 = vmatpush1.msra.mxu0 0.0
  %592 = vmatprep.subr.mxu0 0.0
  %593 = vmatpush1.msra.mxu0 0.0
  %594 = vmatprep.subr.mxu0 0.0
  %595 = vmatpush1.msra.mxu0 0.0
  %596 = vmatprep.subr.mxu0 0.0
  %597 = vmatpush1.msra.mxu0 0.0
  %598 = vmatprep.subr.mxu0 0.0
  %599 = vmatpush1.msra.mxu0 0.0
  %600 = vmatprep.subr.mxu0 0.0
  %601 = vmatpush1.msra.mxu0 0.0
  %602 = vmatprep.subr.mxu0 0.0
  %603 = vmatpush1.msra.mxu0 0.0
  %604 = vmatprep.subr.mxu0 0.0
  %605 = vmatpush1.msra.mxu0 0.0
  %606 = vmatprep.subr.mxu0 0.0
  %607 = vmatpush1.msra.mxu0 0.0
  %608 = vmatprep.subr.mxu0 0.0
  %609 = vmatpush1.msra.mxu0 0.0
  %610 = vmatprep.subr.mxu0 0.0
  %611 = vmatpush1.msra.mxu0 0.0
  %612 = vmatprep.subr.mxu0 0.0
  %613 = vmatpush1.msra.mxu0 0.0
  %614 = vmatprep.subr.mxu0 0.0
  %615 = vmatpush1.msra.mxu0 0.0
  %616 = vmatprep.subr.mxu0 0.0
  %617 = vmatpush1.msra.mxu0 0.0
  %618 = vmatprep.subr.mxu0 0.0
  %619 = vmatpush1.msra.mxu0 0.0
  %620 = vmatprep.subr.mxu0 0.0
  %621 = vmatpush1.msra.mxu0 0.0
  %622 = vmatprep.subr.mxu0 0.0
  %623 = vmatpush1.msra.mxu0 0.0
  %624 = vmatprep.subr.mxu0 0.0
  %625 = vmatpush1.msra.mxu0 0.0
  %626 = vmatprep.subr.mxu0 0.0
  %627 = vmatpush1.msra.mxu0 0.0
  %628 = vmatprep.subr.mxu0 0.0
  %629 = vmatpush1.msra.mxu0 0.0
  %630 = vmatprep.subr.mxu0 0.0
  %631 = vmatpush1.msra.mxu0 0.0
  %632 = vmatprep.subr.mxu0 0.0
  %633 = vmatpush1.msra.mxu0 0.0
  %634 = vmatprep.subr.mxu0 0.0
  %635 = vmatpush1.msra.mxu0 0.0
  %636 = vmatprep.subr.mxu0 0.0
  %637 = vmatpush1.msra.mxu0 0.0
  %638 = vmatprep.subr.mxu0 0.0
  %639 = vmatpush1.msra.mxu0 0.0
  %640 = vmatprep.subr.mxu0 0.0
  %641 = vmatpush1.msra.mxu0 0.0
  %642 = vmatprep.subr.mxu0 0.0
  %643 = vmatpush1.msra.mxu0 0.0
  %644 = vmatprep.subr.mxu0 0.0
  %645 = vmatpush1.msra.mxu0 0.0
  %646 = vmatprep.subr.mxu0 0.0
  %647 = vmatpush1.msra.mxu0 0.0
  %648 = vmatprep.subr.mxu0 0.0
  %649 = vmatpush1.msra.mxu0 0.0
  %650 = vmatprep.subr.mxu0 0.0
  %651 = vmatpush1.msra.mxu0 0.0
  %652 = vmatprep.mubr.f32.mxu0 0.0
  %653 = vmatmul.mubr.f32.gmra.mrb[0].mxu0 %v586
  %v654 = vpop.f32.mrb[0].mxu0
  %v655 = vadd.f32 0.0, %v654
  %v656 = vpop.f32.mrb[0].mxu0
  %657 = vdwg.mxu0
  %v658 = vld [vmem:[%s11 + $0x8] sm:$0xff]
  %v660 = vsel %vm334, %v655, 0
  %662 = vmatprep.subr.mxu0 0.0
  %663 = vmatpush1.msra.mxu0 %v658
  %664 = vmatprep.subr.mxu0 0.0
  %665 = vmatpush1.msra.mxu0 0.0
  %666 = vmatprep.subr.mxu0 0.0
  %667 = vmatpush1.msra.mxu0 0.0
  %668 = vmatprep.subr.mxu0 0.0
  %669 = vmatpush1.msra.mxu0 0.0
  %670 = vmatprep.subr.mxu0 0.0
  %671 = vmatpush1.msra.mxu0 0.0
  %672 = vmatprep.subr.mxu0 0.0
  %673 = vmatpush1.msra.mxu0 0.0
  %674 = vmatprep.subr.mxu0 0.0
  %675 = vmatpush1.msra.mxu0 0.0
  %676 = vmatprep.subr.mxu0 0.0
  %677 = vmatpush1.msra.mxu0 0.0
  %678 = vmatprep.subr.mxu0 0.0
  %679 = vmatpush1.msra.mxu0 0.0
  %680 = vmatprep.subr.mxu0 0.0
  %681 = vmatpush1.msra.mxu0 0.0
  %682 = vmatprep.subr.mxu0 0.0
  %683 = vmatpush1.msra.mxu0 0.0
  %684 = vmatprep.subr.mxu0 0.0
  %685 = vmatpush1.msra.mxu0 0.0
  %686 = vmatprep.subr.mxu0 0.0
  %687 = vmatpush1.msra.mxu0 0.0
  %688 = vmatprep.subr.mxu0 0.0
  %689 = vmatpush1.msra.mxu0 0.0
  %690 = vmatprep.subr.mxu0 0.0
  %691 = vmatpush1.msra.mxu0 0.0
  %692 = vmatprep.subr.mxu0 0.0
  %693 = vmatpush1.msra.mxu0 0.0
  %694 = vmatprep.subr.mxu0 0.0
  %695 = vmatpush1.msra.mxu0 0.0
  %696 = vmatprep.subr.mxu0 0.0
  %697 = vmatpush1.msra.mxu0 0.0
  %698 = vmatprep.subr.mxu0 0.0
  %699 = vmatpush1.msra.mxu0 0.0
  %700 = vmatprep.subr.mxu0 0.0
  %701 = vmatpush1.msra.mxu0 0.0
  %702 = vmatprep.subr.mxu0 0.0
  %703 = vmatpush1.msra.mxu0 0.0
  %704 = vmatprep.subr.mxu0 0.0
  %705 = vmatpush1.msra.mxu0 0.0
  %706 = vmatprep.subr.mxu0 0.0
  %707 = vmatpush1.msra.mxu0 0.0
  %708 = vmatprep.subr.mxu0 0.0
  %709 = vmatpush1.msra.mxu0 0.0
  %710 = vmatprep.subr.mxu0 0.0
  %711 = vmatpush1.msra.mxu0 0.0
  %712 = vmatprep.subr.mxu0 0.0
  %713 = vmatpush1.msra.mxu0 0.0
  %714 = vmatprep.subr.mxu0 0.0
  %715 = vmatpush1.msra.mxu0 0.0
  %716 = vmatprep.subr.mxu0 0.0
  %717 = vmatpush1.msra.mxu0 0.0
  %718 = vmatprep.subr.mxu0 0.0
  %719 = vmatpush1.msra.mxu0 0.0
  %720 = vmatprep.subr.mxu0 0.0
  %721 = vmatpush1.msra.mxu0 0.0
  %722 = vmatprep.subr.mxu0 0.0
  %723 = vmatpush1.msra.mxu0 0.0
  %724 = vmatprep.subr.mxu0 0.0
  %725 = vmatpush1.msra.mxu0 0.0
  %726 = vmatprep.mubr.f32.mxu0 0.0
  %727 = vmatmul.mubr.f32.gmra.mrb[0].mxu0 %v660
  %v728 = vpop.f32.mrb[0].mxu0
  %v729 = vadd.f32 0.0, %v728
  %v730 = vpop.f32.mrb[0].mxu0
  %731 = vdwg.mxu0
  %v733 = vsel %vm334, %v495, 0
  %735 = vmatprep.subr.mxu0 0.0
  %736 = vmatpush1.msra.mxu0 %v498
  %737 = vmatprep.subr.mxu0 0.0
  %738 = vmatpush1.msra.mxu0 0.0
  %739 = vmatprep.subr.mxu0 0.0
  %740 = vmatpush1.msra.mxu0 0.0
  %741 = vmatprep.subr.mxu0 0.0
  %742 = vmatpush1.msra.mxu0 0.0
  %743 = vmatprep.subr.mxu0 0.0
  %744 = vmatpush1.msra.mxu0 0.0
  %745 = vmatprep.subr.mxu0 0.0
  %746 = vmatpush1.msra.mxu0 0.0
  %747 = vmatprep.subr.mxu0 0.0
  %748 = vmatpush1.msra.mxu0 0.0
  %749 = vmatprep.subr.mxu0 0.0
  %750 = vmatpush1.msra.mxu0 0.0
  %751 = vmatprep.subr.mxu0 0.0
  %752 = vmatpush1.msra.mxu0 0.0
  %753 = vmatprep.subr.mxu0 0.0
  %754 = vmatpush1.msra.mxu0 0.0
  %755 = vmatprep.subr.mxu0 0.0
  %756 = vmatpush1.msra.mxu0 0.0
  %757 = vmatprep.subr.mxu0 0.0
  %758 = vmatpush1.msra.mxu0 0.0
  %759 = vmatprep.subr.mxu0 0.0
  %760 = vmatpush1.msra.mxu0 0.0
  %761 = vmatprep.subr.mxu0 0.0
  %762 = vmatpush1.msra.mxu0 0.0
  %763 = vmatprep.subr.mxu0 0.0
  %764 = vmatpush1.msra.mxu0 0.0
  %765 = vmatprep.subr.mxu0 0.0
  %766 = vmatpush1.msra.mxu0 0.0
  %767 = vmatprep.subr.mxu0 0.0
  %768 = vmatpush1.msra.mxu0 0.0
  %769 = vmatprep.subr.mxu0 0.0
  %770 = vmatpush1.msra.mxu0 0.0
  %771 = vmatprep.subr.mxu0 0.0
  %772 = vmatpush1.msra.mxu0 0.0
  %773 = vmatprep.subr.mxu0 0.0
  %774 = vmatpush1.msra.mxu0 0.0
  %775 = vmatprep.subr.mxu0 0.0
  %776 = vmatpush1.msra.mxu0 0.0
  %777 = vmatprep.subr.mxu0 0.0
  %778 = vmatpush1.msra.mxu0 0.0
  %779 = vmatprep.subr.mxu0 0.0
  %780 = vmatpush1.msra.mxu0 0.0
  %781 = vmatprep.subr.mxu0 0.0
  %782 = vmatpush1.msra.mxu0 0.0
  %783 = vmatprep.subr.mxu0 0.0
  %784 = vmatpush1.msra.mxu0 0.0
  %785 = vmatprep.subr.mxu0 0.0
  %786 = vmatpush1.msra.mxu0 0.0
  %787 = vmatprep.subr.mxu0 0.0
  %788 = vmatpush1.msra.mxu0 0.0
  %789 = vmatprep.subr.mxu0 0.0
  %790 = vmatpush1.msra.mxu0 0.0
  %791 = vmatprep.subr.mxu0 0.0
  %792 = vmatpush1.msra.mxu0 0.0
  %793 = vmatprep.subr.mxu0 0.0
  %794 = vmatpush1.msra.mxu0 0.0
  %795 = vmatprep.subr.mxu0 0.0
  %796 = vmatpush1.msra.mxu0 0.0
  %797 = vmatprep.subr.mxu0 0.0
  %798 = vmatpush1.msra.mxu0 0.0
  %799 = vmatprep.mubr.f32.mxu0 0.0
  %800 = vmatmul.mubr.f32.gmra.mrb[0].mxu0 %v733
  %v801 = vpop.f32.mrb[0].mxu0
  %v802 = vadd.f32 %v729, %v801
  %v803 = vpop.f32.mrb[0].mxu0
  %804 = vdwg.mxu0
  %805 = vrot.lane.b32.xlu0 %v325, 112
  %v806 = vpop.permute.xlu0 %805
  %807 = vrot.lane.b32.xlu0 %v324, 88
  %v808 = vpop.permute.xlu0 %807
  %v809 = vsel %vm334, %v806, 0
  %v811 = vsel %vm334, %v808, 0
  %813 = vmatprep.subr.mxu0 0.0
  %814 = vmatpush1.xpose.msra.mxu0 %v811
  %815 = vmatprep.subr.mxu0 0.0
  %816 = vmatpush1.xpose.msra.mxu0 0.0
  %817 = vmatprep.subr.mxu0 0.0
  %818 = vmatpush1.xpose.msra.mxu0 0.0
  %819 = vmatprep.subr.mxu0 0.0
  %820 = vmatpush1.xpose.msra.mxu0 0.0
  %821 = vmatprep.subr.mxu0 0.0
  %822 = vmatpush1.xpose.msra.mxu0 0.0
  %823 = vmatprep.subr.mxu0 0.0
  %824 = vmatpush1.xpose.msra.mxu0 0.0
  %825 = vmatprep.subr.mxu0 0.0
  %826 = vmatpush1.xpose.msra.mxu0 0.0
  %827 = vmatprep.subr.mxu0 0.0
  %828 = vmatpush1.xpose.msra.mxu0 0.0
  %829 = vmatprep.subr.mxu0 0.0
  %830 = vmatpush1.xpose.msra.mxu0 0.0
  %831 = vmatprep.subr.mxu0 0.0
  %832 = vmatpush1.xpose.msra.mxu0 0.0
  %833 = vmatprep.subr.mxu0 0.0
  %834 = vmatpush1.xpose.msra.mxu0 0.0
  %835 = vmatprep.subr.mxu0 0.0
  %836 = vmatpush1.xpose.msra.mxu0 0.0
  %837 = vmatprep.subr.mxu0 0.0
  %838 = vmatpush1.xpose.msra.mxu0 0.0
  %839 = vmatprep.subr.mxu0 0.0
  %840 = vmatpush1.xpose.msra.mxu0 0.0
  %841 = vmatprep.subr.mxu0 0.0
  %842 = vmatpush1.xpose.msra.mxu0 0.0
  %843 = vmatprep.subr.mxu0 0.0
  %844 = vmatpush1.xpose.msra.mxu0 0.0
  %845 = vmatprep.subr.mxu0 0.0
  %846 = vmatpush1.xpose.msra.mxu0 0.0
  %847 = vmatprep.subr.mxu0 0.0
  %848 = vmatpush1.xpose.msra.mxu0 0.0
  %849 = vmatprep.subr.mxu0 0.0
  %850 = vmatpush1.xpose.msra.mxu0 0.0
  %851 = vmatprep.subr.mxu0 0.0
  %852 = vmatpush1.xpose.msra.mxu0 0.0
  %853 = vmatprep.subr.mxu0 0.0
  %854 = vmatpush1.xpose.msra.mxu0 0.0
  %855 = vmatprep.subr.mxu0 0.0
  %856 = vmatpush1.xpose.msra.mxu0 0.0
  %857 = vmatprep.subr.mxu0 0.0
  %858 = vmatpush1.xpose.msra.mxu0 0.0
  %859 = vmatprep.subr.mxu0 0.0
  %860 = vmatpush1.xpose.msra.mxu0 0.0
  %861 = vmatprep.subr.mxu0 0.0
  %862 = vmatpush1.xpose.msra.mxu0 0.0
  %863 = vmatprep.subr.mxu0 0.0
  %864 = vmatpush1.xpose.msra.mxu0 0.0
  %865 = vmatprep.subr.mxu0 0.0
  %866 = vmatpush1.xpose.msra.mxu0 0.0
  %867 = vmatprep.subr.mxu0 0.0
  %868 = vmatpush1.xpose.msra.mxu0 0.0
  %869 = vmatprep.subr.mxu0 0.0
  %870 = vmatpush1.xpose.msra.mxu0 0.0
  %871 = vmatprep.subr.mxu0 0.0
  %872 = vmatpush1.xpose.msra.mxu0 0.0
  %873 = vmatprep.subr.mxu0 0.0
  %874 = vmatpush1.xpose.msra.mxu0 0.0
  %875 = vmatprep.subr.mxu0 0.0
  %876 = vmatpush1.xpose.msra.mxu0 0.0
  %877 = vmatprep.mubr.f32.mxu0 0.0
  %878 = vmatmul.mubr.f32.gmra.mrb[0].mxu0 %v809
  %v879 = vpop.f32.mrb[0].mxu0
  %v880 = vadd.f32 0.0, %v879
  %v881 = vpop.f32.mrb[0].mxu0
  %882 = vdwg.mxu0
  %v883 = vsel %vm330, %v880, -1e+30
  %v884 = vsel %vm334, %v883, -inf
  %885 = vmax.xlane.f32.xlu0 %v884
  %v886 = vpop.xlane.xlu0 %885
  %v887 = vsub.f32 %v883, %v886
  %v888 = vmul.f32 %v887, 1.442695
  %v889 = vpow.pop %v888
  %v890 = vsel %vm334, %v889, 0.0
  %891 = vadd.xlane.f32.xlu0 %v890
  %v892 = vpop.xlane.xlu0 %891
  %v893 = vrcp.pop %v892
  %v894 = vmul.f32 %v889, %v893
  %895 = vrot.lane.b32.xlu0 %v150, 72
  %v896 = vpop.permute.xlu0 %895
  %v899 = vsel %vm334, %v894, 0
  %901 = vmatprep.subr.mxu0 0.0
  %902 = vmatpush1.msra.mxu0 %v896
  %903 = vmatprep.subr.mxu0 0.0
  %904 = vmatpush1.msra.mxu0 0.0
  %905 = vmatprep.subr.mxu0 0.0
  %906 = vmatpush1.msra.mxu0 0.0
  %907 = vmatprep.subr.mxu0 0.0
  %908 = vmatpush1.msra.mxu0 0.0
  %909 = vmatprep.subr.mxu0 0.0
  %910 = vmatpush1.msra.mxu0 0.0
  %911 = vmatprep.subr.mxu0 0.0
  %912 = vmatpush1.msra.mxu0 0.0
  %913 = vmatprep.subr.mxu0 0.0
  %914 = vmatpush1.msra.mxu0 0.0
  %915 = vmatprep.subr.mxu0 0.0
  %916 = vmatpush1.msra.mxu0 0.0
  %917 = vmatprep.subr.mxu0 0.0
  %918 = vmatpush1.msra.mxu0 0.0
  %919 = vmatprep.subr.mxu0 0.0
  %920 = vmatpush1.msra.mxu0 0.0
  %921 = vmatprep.subr.mxu0 0.0
  %922 = vmatpush1.msra.mxu0 0.0
  %923 = vmatprep.subr.mxu0 0.0
  %924 = vmatpush1.msra.mxu0 0.0
  %925 = vmatprep.subr.mxu0 0.0
  %926 = vmatpush1.msra.mxu0 0.0
  %927 = vmatprep.subr.mxu0 0.0
  %928 = vmatpush1.msra.mxu0 0.0
  %929 = vmatprep.subr.mxu0 0.0
  %930 = vmatpush1.msra.mxu0 0.0
  %931 = vmatprep.subr.mxu0 0.0
  %932 = vmatpush1.msra.mxu0 0.0
  %933 = vmatprep.subr.mxu0 0.0
  %934 = vmatpush1.msra.mxu0 0.0
  %935 = vmatprep.subr.mxu0 0.0
  %936 = vmatpush1.msra.mxu0 0.0
  %937 = vmatprep.subr.mxu0 0.0
  %938 = vmatpush1.msra.mxu0 0.0
  %939 = vmatprep.subr.mxu0 0.0
  %940 = vmatpush1.msra.mxu0 0.0
  %941 = vmatprep.subr.mxu0 0.0
  %942 = vmatpush1.msra.mxu0 0.0
  %943 = vmatprep.subr.mxu0 0.0
  %944 = vmatpush1.msra.mxu0 0.0
  %945 = vmatprep.subr.mxu0 0.0
  %946 = vmatpush1.msra.mxu0 0.0
  %947 = vmatprep.subr.mxu0 0.0
  %948 = vmatpush1.msra.mxu0 0.0
  %949 = vmatprep.subr.mxu0 0.0
  %950 = vmatpush1.msra.mxu0 0.0
  %951 = vmatprep.subr.mxu0 0.0
  %952 = vmatpush1.msra.mxu0 0.0
  %953 = vmatprep.subr.mxu0 0.0
  %954 = vmatpush1.msra.mxu0 0.0
  %955 = vmatprep.subr.mxu0 0.0
  %956 = vmatpush1.msra.mxu0 0.0
  %957 = vmatprep.subr.mxu0 0.0
  %958 = vmatpush1.msra.mxu0 0.0
  %959 = vmatprep.subr.mxu0 0.0
  %960 = vmatpush1.msra.mxu0 0.0
  %961 = vmatprep.subr.mxu0 0.0
  %962 = vmatpush1.msra.mxu0 0.0
  %963 = vmatprep.subr.mxu0 0.0
  %964 = vmatpush1.msra.mxu0 0.0
  %965 = vmatprep.mubr.f32.mxu0 0.0
  %966 = vmatmul.mubr.f32.gmra.mrb[0].mxu0 %v899
  %v967 = vpop.f32.mrb[0].mxu0
  %v968 = vadd.f32 0.0, %v967
  %v969 = vpop.f32.mrb[0].mxu0
  %970 = vdwg.mxu0
  %v971 = vld [vmem:[%s11 + $0x10] sm:$0xff]
  %v973 = vsel %vm334, %v968, 0
  %975 = vmatprep.subr.mxu0 0.0
  %976 = vmatpush1.msra.mxu0 %v971
  %977 = vmatprep.subr.mxu0 0.0
  %978 = vmatpush1.msra.mxu0 0.0
  %979 = vmatprep.subr.mxu0 0.0
  %980 = vmatpush1.msra.mxu0 0.0
  %981 = vmatprep.subr.mxu0 0.0
  %982 = vmatpush1.msra.mxu0 0.0
  %983 = vmatprep.subr.mxu0 0.0
  %984 = vmatpush1.msra.mxu0 0.0
  %985 = vmatprep.subr.mxu0 0.0
  %986 = vmatpush1.msra.mxu0 0.0
  %987 = vmatprep.subr.mxu0 0.0
  %988 = vmatpush1.msra.mxu0 0.0
  %989 = vmatprep.subr.mxu0 0.0
  %990 = vmatpush1.msra.mxu0 0.0
  %991 = vmatprep.subr.mxu0 0.0
  %992 = vmatpush1.msra.mxu0 0.0
  %993 = vmatprep.subr.mxu0 0.0
  %994 = vmatpush1.msra.mxu0 0.0
  %995 = vmatprep.subr.mxu0 0.0
  %996 = vmatpush1.msra.mxu0 0.0
  %997 = vmatprep.subr.mxu0 0.0
  %998 = vmatpush1.msra.mxu0 0.0
  %999 = vmatprep.subr.mxu0 0.0
  %1000 = vmatpush1.msra.mxu0 0.0
  %1001 = vmatprep.subr.mxu0 0.0
  %1002 = vmatpush1.msra.mxu0 0.0
  %1003 = vmatprep.subr.mxu0 0.0
  %1004 = vmatpush1.msra.mxu0 0.0
  %1005 = vmatprep.subr.mxu0 0.0
  %1006 = vmatpush1.msra.mxu0 0.0
  %1007 = vmatprep.subr.mxu0 0.0
  %1008 = vmatpush1.msra.mxu0 0.0
  %1009 = vmatprep.subr.mxu0 0.0
  %1010 = vmatpush1.msra.mxu0 0.0
  %1011 = vmatprep.subr.mxu0 0.0
  %1012 = vmatpush1.msra.mxu0 0.0
  %1013 = vmatprep.subr.mxu0 0.0
  %1014 = vmatpush1.msra.mxu0 0.0
  %1015 = vmatprep.subr.mxu0 0.0
  %1016 = vmatpush1.msra.mxu0 0.0
  %1017 = vmatprep.subr.mxu0 0.0
  %1018 = vmatpush1.msra.mxu0 0.0
  %1019 = vmatprep.subr.mxu0 0.0
  %1020 = vmatpush1.msra.mxu0 0.0
  %1021 = vmatprep.subr.mxu0 0.0
  %1022 = vmatpush1.msra.mxu0 0.0
  %1023 = vmatprep.subr.mxu0 0.0
  %1024 = vmatpush1.msra.mxu0 0.0
  %1025 = vmatprep.subr.mxu0 0.0
  %1026 = vmatpush1.msra.mxu0 0.0
  %1027 = vmatprep.subr.mxu0 0.0
  %1028 = vmatpush1.msra.mxu0 0.0
  %1029 = vmatprep.subr.mxu0 0.0
  %1030 = vmatpush1.msra.mxu0 0.0
  %1031 = vmatprep.subr.mxu0 0.0
  %1032 = vmatpush1.msra.mxu0 0.0
  %1033 = vmatprep.subr.mxu0 0.0
  %1034 = vmatpush1.msra.mxu0 0.0
  %1035 = vmatprep.subr.mxu0 0.0
  %1036 = vmatpush1.msra.mxu0 0.0
  %1037 = vmatprep.subr.mxu0 0.0
  %1038 = vmatpush1.msra.mxu0 0.0
  %1039 = vmatprep.mubr.f32.mxu0 0.0
  %1040 = vmatmul.mubr.f32.gmra.mrb[0].mxu0 %v973
  %v1041 = vpop.f32.mrb[0].mxu0
  %v1042 = vadd.f32 0.0, %v1041
  %v1043 = vpop.f32.mrb[0].mxu0
  %1044 = vdwg.mxu0
  %v1045 = vadd.f32 %v802, %v1042
  %1046 = vrot.lane.b32.xlu0 %v325, 104
  %v1047 = vpop.permute.xlu0 %1046
  %v1048 = vsel %vm334, %v1047, 0
  %1050 = vmatprep.subr.mxu0 0.0
  %1051 = vmatpush1.xpose.msra.mxu0 %v811
  %1052 = vmatprep.subr.mxu0 0.0
  %1053 = vmatpush1.xpose.msra.mxu0 0.0
  %1054 = vmatprep.subr.mxu0 0.0
  %1055 = vmatpush1.xpose.msra.mxu0 0.0
  %1056 = vmatprep.subr.mxu0 0.0
  %1057 = vmatpush1.xpose.msra.mxu0 0.0
  %1058 = vmatprep.subr.mxu0 0.0
  %1059 = vmatpush1.xpose.msra.mxu0 0.0
  %1060 = vmatprep.subr.mxu0 0.0
  %1061 = vmatpush1.xpose.msra.mxu0 0.0
  %1062 = vmatprep.subr.mxu0 0.0
  %1063 = vmatpush1.xpose.msra.mxu0 0.0
  %1064 = vmatprep.subr.mxu0 0.0
  %1065 = vmatpush1.xpose.msra.mxu0 0.0
  %1066 = vmatprep.subr.mxu0 0.0
  %1067 = vmatpush1.xpose.msra.mxu0 0.0
  %1068 = vmatprep.subr.mxu0 0.0
  %1069 = vmatpush1.xpose.msra.mxu0 0.0
  %1070 = vmatprep.subr.mxu0 0.0
  %1071 = vmatpush1.xpose.msra.mxu0 0.0
  %1072 = vmatprep.subr.mxu0 0.0
  %1073 = vmatpush1.xpose.msra.mxu0 0.0
  %1074 = vmatprep.subr.mxu0 0.0
  %1075 = vmatpush1.xpose.msra.mxu0 0.0
  %1076 = vmatprep.subr.mxu0 0.0
  %1077 = vmatpush1.xpose.msra.mxu0 0.0
  %1078 = vmatprep.subr.mxu0 0.0
  %1079 = vmatpush1.xpose.msra.mxu0 0.0
  %1080 = vmatprep.subr.mxu0 0.0
  %1081 = vmatpush1.xpose.msra.mxu0 0.0
  %1082 = vmatprep.subr.mxu0 0.0
  %1083 = vmatpush1.xpose.msra.mxu0 0.0
  %1084 = vmatprep.subr.mxu0 0.0
  %1085 = vmatpush1.xpose.msra.mxu0 0.0
  %1086 = vmatprep.subr.mxu0 0.0
  %1087 = vmatpush1.xpose.msra.mxu0 0.0
  %1088 = vmatprep.subr.mxu0 0.0
  %1089 = vmatpush1.xpose.msra.mxu0 0.0
  %1090 = vmatprep.subr.mxu0 0.0
  %1091 = vmatpush1.xpose.msra.mxu0 0.0
  %1092 = vmatprep.subr.mxu0 0.0
  %1093 = vmatpush1.xpose.msra.mxu0 0.0
  %1094 = vmatprep.subr.mxu0 0.0
  %1095 = vmatpush1.xpose.msra.mxu0 0.0
  %1096 = vmatprep.subr.mxu0 0.0
  %1097 = vmatpush1.xpose.msra.mxu0 0.0
  %1098 = vmatprep.subr.mxu0 0.0
  %1099 = vmatpush1.xpose.msra.mxu0 0.0
  %1100 = vmatprep.subr.mxu0 0.0
  %1101 = vmatpush1.xpose.msra.mxu0 0.0
  %1102 = vmatprep.subr.mxu0 0.0
  %1103 = vmatpush1.xpose.msra.mxu0 0.0
  %1104 = vmatprep.subr.mxu0 0.0
  %1105 = vmatpush1.xpose.msra.mxu0 0.0
  %1106 = vmatprep.subr.mxu0 0.0
  %1107 = vmatpush1.xpose.msra.mxu0 0.0
  %1108 = vmatprep.subr.mxu0 0.0
  %1109 = vmatpush1.xpose.msra.mxu0 0.0
  %1110 = vmatprep.subr.mxu0 0.0
  %1111 = vmatpush1.xpose.msra.mxu0 0.0
  %1112 = vmatprep.subr.mxu0 0.0
  %1113 = vmatpush1.xpose.msra.mxu0 0.0
  %1114 = vmatprep.mubr.f32.mxu0 0.0
  %1115 = vmatmul.mubr.f32.gmra.mrb[0].mxu0 %v1048
  %v1116 = vpop.f32.mrb[0].mxu0
  %v1117 = vadd.f32 0.0, %v1116
  %v1118 = vpop.f32.mrb[0].mxu0
  %1119 = vdwg.mxu0
  %v1120 = vsel %vm330, %v1117, -1e+30
  %v1121 = vsel %vm334, %v1120, -inf
  %1122 = vmax.xlane.f32.xlu0 %v1121
  %v1123 = vpop.xlane.xlu0 %1122
  %v1124 = vsub.f32 %v1120, %v1123
  %v1125 = vmul.f32 %v1124, 1.442695
  %v1126 = vpow.pop %v1125
  %v1127 = vsel %vm334, %v1126, 0.0
  %1128 = vadd.xlane.f32.xlu0 %v1127
  %v1129 = vpop.xlane.xlu0 %1128
  %v1130 = vrcp.pop %v1129
  %v1131 = vmul.f32 %v1126, %v1130
  %v1133 = vsel %vm334, %v1131, 0
  %1135 = vmatprep.subr.mxu0 0.0
  %1136 = vmatpush1.msra.mxu0 %v896
  %1137 = vmatprep.subr.mxu0 0.0
  %1138 = vmatpush1.msra.mxu0 0.0
  %1139 = vmatprep.subr.mxu0 0.0
  %1140 = vmatpush1.msra.mxu0 0.0
  %1141 = vmatprep.subr.mxu0 0.0
  %1142 = vmatpush1.msra.mxu0 0.0
  %1143 = vmatprep.subr.mxu0 0.0
  %1144 = vmatpush1.msra.mxu0 0.0
  %1145 = vmatprep.subr.mxu0 0.0
  %1146 = vmatpush1.msra.mxu0 0.0
  %1147 = vmatprep.subr.mxu0 0.0
  %1148 = vmatpush1.msra.mxu0 0.0
  %1149 = vmatprep.subr.mxu0 0.0
  %1150 = vmatpush1.msra.mxu0 0.0
  %1151 = vmatprep.subr.mxu0 0.0
  %1152 = vmatpush1.msra.mxu0 0.0
  %1153 = vmatprep.subr.mxu0 0.0
  %1154 = vmatpush1.msra.mxu0 0.0
  %1155 = vmatprep.subr.mxu0 0.0
  %1156 = vmatpush1.msra.mxu0 0.0
  %1157 = vmatprep.subr.mxu0 0.0
  %1158 = vmatpush1.msra.mxu0 0.0
  %1159 = vmatprep.subr.mxu0 0.0
  %1160 = vmatpush1.msra.mxu0 0.0
  %1161 = vmatprep.subr.mxu0 0.0
  %1162 = vmatpush1.msra.mxu0 0.0
  %1163 = vmatprep.subr.mxu0 0.0
  %1164 = vmatpush1.msra.mxu0 0.0
  %1165 = vmatprep.subr.mxu0 0.0
  %1166 = vmatpush1.msra.mxu0 0.0
  %1167 = vmatprep.subr.mxu0 0.0
  %1168 = vmatpush1.msra.mxu0 0.0
  %1169 = vmatprep.subr.mxu0 0.0
  %1170 = vmatpush1.msra.mxu0 0.0
  %1171 = vmatprep.subr.mxu0 0.0
  %1172 = vmatpush1.msra.mxu0 0.0
  %1173 = vmatprep.subr.mxu0 0.0
  %1174 = vmatpush1.msra.mxu0 0.0
  %1175 = vmatprep.subr.mxu0 0.0
  %1176 = vmatpush1.msra.mxu0 0.0
  %1177 = vmatprep.subr.mxu0 0.0
  %1178 = vmatpush1.msra.mxu0 0.0
  %1179 = vmatprep.subr.mxu0 0.0
  %1180 = vmatpush1.msra.mxu0 0.0
  %1181 = vmatprep.subr.mxu0 0.0
  %1182 = vmatpush1.msra.mxu0 0.0
  %1183 = vmatprep.subr.mxu0 0.0
  %1184 = vmatpush1.msra.mxu0 0.0
  %1185 = vmatprep.subr.mxu0 0.0
  %1186 = vmatpush1.msra.mxu0 0.0
  %1187 = vmatprep.subr.mxu0 0.0
  %1188 = vmatpush1.msra.mxu0 0.0
  %1189 = vmatprep.subr.mxu0 0.0
  %1190 = vmatpush1.msra.mxu0 0.0
  %1191 = vmatprep.subr.mxu0 0.0
  %1192 = vmatpush1.msra.mxu0 0.0
  %1193 = vmatprep.subr.mxu0 0.0
  %1194 = vmatpush1.msra.mxu0 0.0
  %1195 = vmatprep.subr.mxu0 0.0
  %1196 = vmatpush1.msra.mxu0 0.0
  %1197 = vmatprep.subr.mxu0 0.0
  %1198 = vmatpush1.msra.mxu0 0.0
  %1199 = vmatprep.mubr.f32.mxu0 0.0
  %1200 = vmatmul.mubr.f32.gmra.mrb[0].mxu0 %v1133
  %v1201 = vpop.f32.mrb[0].mxu0
  %v1202 = vadd.f32 0.0, %v1201
  %v1203 = vpop.f32.mrb[0].mxu0
  %1204 = vdwg.mxu0
  %v1205 = vld [vmem:[%s11 + $0x18] sm:$0xff]
  %v1207 = vsel %vm334, %v1202, 0
  %1209 = vmatprep.subr.mxu0 0.0
  %1210 = vmatpush1.msra.mxu0 %v1205
  %1211 = vmatprep.subr.mxu0 0.0
  %1212 = vmatpush1.msra.mxu0 0.0
  %1213 = vmatprep.subr.mxu0 0.0
  %1214 = vmatpush1.msra.mxu0 0.0
  %1215 = vmatprep.subr.mxu0 0.0
  %1216 = vmatpush1.msra.mxu0 0.0
  %1217 = vmatprep.subr.mxu0 0.0
  %1218 = vmatpush1.msra.mxu0 0.0
  %1219 = vmatprep.subr.mxu0 0.0
  %1220 = vmatpush1.msra.mxu0 0.0
  %1221 = vmatprep.subr.mxu0 0.0
  %1222 = vmatpush1.msra.mxu0 0.0
  %1223 = vmatprep.subr.mxu0 0.0
  %1224 = vmatpush1.msra.mxu0 0.0
  %1225 = vmatprep.subr.mxu0 0.0
  %1226 = vmatpush1.msra.mxu0 0.0
  %1227 = vmatprep.subr.mxu0 0.0
  %1228 = vmatpush1.msra.mxu0 0.0
  %1229 = vmatprep.subr.mxu0 0.0
  %1230 = vmatpush1.msra.mxu0 0.0
  %1231 = vmatprep.subr.mxu0 0.0
  %1232 = vmatpush1.msra.mxu0 0.0
  %1233 = vmatprep.subr.mxu0 0.0
  %1234 = vmatpush1.msra.mxu0 0.0
  %1235 = vmatprep.subr.mxu0 0.0
  %1236 = vmatpush1.msra.mxu0 0.0
  %1237 = vmatprep.subr.mxu0 0.0
  %1238 = vmatpush1.msra.mxu0 0.0
  %1239 = vmatprep.subr.mxu0 0.0
  %1240 = vmatpush1.msra.mxu0 0.0
  %1241 = vmatprep.subr.mxu0 0.0
  %1242 = vmatpush1.msra.mxu0 0.0
  %1243 = vmatprep.subr.mxu0 0.0
  %1244 = vmatpush1.msra.mxu0 0.0
  %1245 = vmatprep.subr.mxu0 0.0
  %1246 = vmatpush1.msra.mxu0 0.0
  %1247 = vmatprep.subr.mxu0 0.0
  %1248 = vmatpush1.msra.mxu0 0.0
  %1249 = vmatprep.subr.mxu0 0.0
  %1250 = vmatpush1.msra.mxu0 0.0
  %1251 = vmatprep.subr.mxu0 0.0
  %1252 = vmatpush1.msra.mxu0 0.0
  %1253 = vmatprep.subr.mxu0 0.0
  %1254 = vmatpush1.msra.mxu0 0.0
  %1255 = vmatprep.subr.mxu0 0.0
  %1256 = vmatpush1.msra.mxu0 0.0
  %1257 = vmatprep.subr.mxu0 0.0
  %1258 = vmatpush1.msra.mxu0 0.0
  %1259 = vmatprep.subr.mxu0 0.0
  %1260 = vmatpush1.msra.mxu0 0.0
  %1261 = vmatprep.subr.mxu0 0.0
  %1262 = vmatpush1.msra.mxu0 0.0
  %1263 = vmatprep.subr.mxu0 0.0
  %1264 = vmatpush1.msra.mxu0 0.0
  %1265 = vmatprep.subr.mxu0 0.0
  %1266 = vmatpush1.msra.mxu0 0.0
  %1267 = vmatprep.subr.mxu0 0.0
  %1268 = vmatpush1.msra.mxu0 0.0
  %1269 = vmatprep.subr.mxu0 0.0
  %1270 = vmatpush1.msra.mxu0 0.0
  %1271 = vmatprep.subr.mxu0 0.0
  %1272 = vmatpush1.msra.mxu0 0.0
  %1273 = vmatprep.mubr.f32.mxu0 0.0
  %1274 = vmatmul.mubr.f32.gmra.mrb[0].mxu0 %v1207
  %v1275 = vpop.f32.mrb[0].mxu0
  %v1276 = vadd.f32 0.0, %v1275
  %v1277 = vpop.f32.mrb[0].mxu0
  %1278 = vdwg.mxu0
  %v1279 = vadd.f32 %v1045, %v1276
  %v1280 = vadd.f32 %v50, %v1279
  %v1281 = vld [vmem:[%s8] sm:$0x1]
  %v1282 = vmul.f32 %v1280, %v1280
  %v1283 = vsel %vm53, %v1282, 0.0
  %1284 = vadd.xlane.f32.xlu0 %v1283
  %v1285 = vpop.xlane.xlu0 %1284
  %v1286 = vmul.f32 %v1285, %v57
  %v1287 = vadd.f32 %v1286, 1e-05
  %v1288 = vrsqrt.pop %v1287
  %v1289 = vmul.f32 %v1280, %v1288
  %v1291 = vlaneseq
  %v1292 = vshrl.u32 %v1291, 7
  %v1293 = vsub.s32 0, %v1292
  %v1294 = vrot.slane %v1281, %v1293
  %v1296 = vmul.f32 %v1289, %v1294
  %v1297 = vld [vmem:[%s12] sm:$0xff]
  %v1298 = vld [vmem:[%s12 + $0x8] sm:$0xff]
  %v1299 = vld [vmem:[%s12 + $0x10] sm:$0xff]
  %v1300 = vld [vmem:[%s12 + $0x18] sm:$0xff]
  %v1302 = vsel %vm53, %v1296, 0
  %1304 = vmatprep.subr.mxu0 0.0
  %1305 = vmatpush1.msra.mxu0 %v1297
  %1306 = vmatprep.subr.mxu0 0.0
  %1307 = vmatpush1.msra.mxu0 %v1298
  %1308 = vmatprep.subr.mxu0 0.0
  %1309 = vmatpush1.msra.mxu0 %v1299
  %1310 = vmatprep.subr.mxu0 0.0
  %1311 = vmatpush1.msra.mxu0 %v1300
  %1312 = vmatprep.subr.mxu0 0.0
  %1313 = vmatpush1.msra.mxu0 0.0
  %1314 = vmatprep.subr.mxu0 0.0
  %1315 = vmatpush1.msra.mxu0 0.0
  %1316 = vmatprep.subr.mxu0 0.0
  %1317 = vmatpush1.msra.mxu0 0.0
  %1318 = vmatprep.subr.mxu0 0.0
  %1319 = vmatpush1.msra.mxu0 0.0
  %1320 = vmatprep.subr.mxu0 0.0
  %1321 = vmatpush1.msra.mxu0 0.0
  %1322 = vmatprep.subr.mxu0 0.0
  %1323 = vmatpush1.msra.mxu0 0.0
  %1324 = vmatprep.subr.mxu0 0.0
  %1325 = vmatpush1.msra.mxu0 0.0
  %1326 = vmatprep.subr.mxu0 0.0
  %1327 = vmatpush1.msra.mxu0 0.0
  %1328 = vmatprep.subr.mxu0 0.0
  %1329 = vmatpush1.msra.mxu0 0.0
  %1330 = vmatprep.subr.mxu0 0.0
  %1331 = vmatpush1.msra.mxu0 0.0
  %1332 = vmatprep.subr.mxu0 0.0
  %1333 = vmatpush1.msra.mxu0 0.0
  %1334 = vmatprep.subr.mxu0 0.0
  %1335 = vmatpush1.msra.mxu0 0.0
  %1336 = vmatprep.subr.mxu0 0.0
  %1337 = vmatpush1.msra.mxu0 0.0
  %1338 = vmatprep.subr.mxu0 0.0
  %1339 = vmatpush1.msra.mxu0 0.0
  %1340 = vmatprep.subr.mxu0 0.0
  %1341 = vmatpush1.msra.mxu0 0.0
  %1342 = vmatprep.subr.mxu0 0.0
  %1343 = vmatpush1.msra.mxu0 0.0
  %1344 = vmatprep.subr.mxu0 0.0
  %1345 = vmatpush1.msra.mxu0 0.0
  %1346 = vmatprep.subr.mxu0 0.0
  %1347 = vmatpush1.msra.mxu0 0.0
  %1348 = vmatprep.subr.mxu0 0.0
  %1349 = vmatpush1.msra.mxu0 0.0
  %1350 = vmatprep.subr.mxu0 0.0
  %1351 = vmatpush1.msra.mxu0 0.0
  %1352 = vmatprep.subr.mxu0 0.0
  %1353 = vmatpush1.msra.mxu0 0.0
  %1354 = vmatprep.subr.mxu0 0.0
  %1355 = vmatpush1.msra.mxu0 0.0
  %1356 = vmatprep.subr.mxu0 0.0
  %1357 = vmatpush1.msra.mxu0 0.0
  %1358 = vmatprep.subr.mxu0 0.0
  %1359 = vmatpush1.msra.mxu0 0.0
  %1360 = vmatprep.subr.mxu0 0.0
  %1361 = vmatpush1.msra.mxu0 0.0
  %1362 = vmatprep.subr.mxu0 0.0
  %1363 = vmatpush1.msra.mxu0 0.0
  %1364 = vmatprep.subr.mxu0 0.0
  %1365 = vmatpush1.msra.mxu0 0.0
  %1366 = vmatprep.subr.mxu0 0.0
  %1367 = vmatpush1.msra.mxu0 0.0
  %1368 = vmatprep.mubr.f32.mxu0 0.0
  %1369 = vmatmul.mubr.f32.gmra.mrb[0].mxu0 %v1302
  %v1370 = vpop.f32.mrb[0].mxu0
  %v1371 = vadd.f32 0.0, %v1370
  %v1372 = vpop.f32.mrb[0].mxu0
  %1373 = vdwg.mxu0
  %v1374 = vld [vmem:[%s13] sm:$0xff]
  %v1375 = vld [vmem:[%s13 + $0x8] sm:$0xff]
  %v1376 = vld [vmem:[%s13 + $0x10] sm:$0xff]
  %v1377 = vld [vmem:[%s13 + $0x18] sm:$0xff]
  %1378 = vmatprep.subr.mxu0 0.0
  %1379 = vmatpush1.msra.mxu0 %v1374
  %1380 = vmatprep.subr.mxu0 0.0
  %1381 = vmatpush1.msra.mxu0 %v1375
  %1382 = vmatprep.subr.mxu0 0.0
  %1383 = vmatpush1.msra.mxu0 %v1376
  %1384 = vmatprep.subr.mxu0 0.0
  %1385 = vmatpush1.msra.mxu0 %v1377
  %1386 = vmatprep.subr.mxu0 0.0
  %1387 = vmatpush1.msra.mxu0 0.0
  %1388 = vmatprep.subr.mxu0 0.0
  %1389 = vmatpush1.msra.mxu0 0.0
  %1390 = vmatprep.subr.mxu0 0.0
  %1391 = vmatpush1.msra.mxu0 0.0
  %1392 = vmatprep.subr.mxu0 0.0
  %1393 = vmatpush1.msra.mxu0 0.0
  %1394 = vmatprep.subr.mxu0 0.0
  %1395 = vmatpush1.msra.mxu0 0.0
  %1396 = vmatprep.subr.mxu0 0.0
  %1397 = vmatpush1.msra.mxu0 0.0
  %1398 = vmatprep.subr.mxu0 0.0
  %1399 = vmatpush1.msra.mxu0 0.0
  %1400 = vmatprep.subr.mxu0 0.0
  %1401 = vmatpush1.msra.mxu0 0.0
  %1402 = vmatprep.subr.mxu0 0.0
  %1403 = vmatpush1.msra.mxu0 0.0
  %1404 = vmatprep.subr.mxu0 0.0
  %1405 = vmatpush1.msra.mxu0 0.0
  %1406 = vmatprep.subr.mxu0 0.0
  %1407 = vmatpush1.msra.mxu0 0.0
  %1408 = vmatprep.subr.mxu0 0.0
  %1409 = vmatpush1.msra.mxu0 0.0
  %1410 = vmatprep.subr.mxu0 0.0
  %1411 = vmatpush1.msra.mxu0 0.0
  %1412 = vmatprep.subr.mxu0 0.0
  %1413 = vmatpush1.msra.mxu0 0.0
  %1414 = vmatprep.subr.mxu0 0.0
  %1415 = vmatpush1.msra.mxu0 0.0
  %1416 = vmatprep.subr.mxu0 0.0
  %1417 = vmatpush1.msra.mxu0 0.0
  %1418 = vmatprep.subr.mxu0 0.0
  %1419 = vmatpush1.msra.mxu0 0.0
  %1420 = vmatprep.subr.mxu0 0.0
  %1421 = vmatpush1.msra.mxu0 0.0
  %1422 = vmatprep.subr.mxu0 0.0
  %1423 = vmatpush1.msra.mxu0 0.0
  %1424 = vmatprep.subr.mxu0 0.0
  %1425 = vmatpush1.msra.mxu0 0.0
  %1426 = vmatprep.subr.mxu0 0.0
  %1427 = vmatpush1.msra.mxu0 0.0
  %1428 = vmatprep.subr.mxu0 0.0
  %1429 = vmatpush1.msra.mxu0 0.0
  %1430 = vmatprep.subr.mxu0 0.0
  %1431 = vmatpush1.msra.mxu0 0.0
  %1432 = vmatprep.subr.mxu0 0.0
  %1433 = vmatpush1.msra.mxu0 0.0
  %1434 = vmatprep.subr.mxu0 0.0
  %1435 = vmatpush1.msra.mxu0 0.0
  %1436 = vmatprep.subr.mxu0 0.0
  %1437 = vmatpush1.msra.mxu0 0.0
  %1438 = vmatprep.subr.mxu0 0.0
  %1439 = vmatpush1.msra.mxu0 0.0
  %1440 = vmatprep.subr.mxu0 0.0
  %1441 = vmatpush1.msra.mxu0 0.0
  %1442 = vmatprep.mubr.f32.mxu0 0.0
  %1443 = vmatmul.mubr.f32.gmra.mrb[0].mxu0 %v1302
  %v1444 = vpop.f32.mrb[0].mxu0
  %v1445 = vadd.f32 0.0, %v1444
  %v1446 = vpop.f32.mrb[0].mxu0
  %1447 = vdwg.mxu0
  %v1448 = vxor.u32 %v1371, 2147483648
  %v1449 = vmul.f32 %v1448, 1.442695
  %v1450 = vpow.pop %v1449
  %v1451 = vadd.f32 %v1450, 1.0
  %v1452 = vrcp.pop %v1451
  %v1453 = vmul.f32 1.0, %v1452
  %v1454 = vmul.f32 %v1371, %v1453
  %v1455 = vmul.f32 %v1454, %v1445
  %v1456 = vld [vmem:[%s14] sm:$0xff]
  %v1457 = vld [vmem:[%s14 + $0x8] sm:$0xff]
  %v1458 = vld [vmem:[%s14 + $0x10] sm:$0xff]
  %v1459 = vld [vmem:[%s14 + $0x18] sm:$0xff]
  %v1460 = vld [vmem:[%s14 + $0x20] sm:$0xff]
  %v1461 = vld [vmem:[%s14 + $0x28] sm:$0xff]
  %v1462 = vld [vmem:[%s14 + $0x30] sm:$0xff]
  %v1463 = vld [vmem:[%s14 + $0x38] sm:$0xff]
  %vm1464 = vcmask 523264
  %v1466 = vsel %vm1464, %v1455, 0
  %1468 = vmatprep.subr.mxu0 0.0
  %1469 = vmatpush1.msra.mxu0 %v1456
  %1470 = vmatprep.subr.mxu0 0.0
  %1471 = vmatpush1.msra.mxu0 %v1457
  %1472 = vmatprep.subr.mxu0 0.0
  %1473 = vmatpush1.msra.mxu0 %v1458
  %1474 = vmatprep.subr.mxu0 0.0
  %1475 = vmatpush1.msra.mxu0 %v1459
  %1476 = vmatprep.subr.mxu0 0.0
  %1477 = vmatpush1.msra.mxu0 %v1460
  %1478 = vmatprep.subr.mxu0 0.0
  %1479 = vmatpush1.msra.mxu0 %v1461
  %1480 = vmatprep.subr.mxu0 0.0
  %1481 = vmatpush1.msra.mxu0 %v1462
  %1482 = vmatprep.subr.mxu0 0.0
  %1483 = vmatpush1.msra.mxu0 %v1463
  %1484 = vmatprep.subr.mxu0 0.0
  %1485 = vmatpush1.msra.mxu0 0.0
  %1486 = vmatprep.subr.mxu0 0.0
  %1487 = vmatpush1.msra.mxu0 0.0
  %1488 = vmatprep.subr.mxu0 0.0
  %1489 = vmatpush1.msra.mxu0 0.0
  %1490 = vmatprep.subr.mxu0 0.0
  %1491 = vmatpush1.msra.mxu0 0.0
  %1492 = vmatprep.subr.mxu0 0.0
  %1493 = vmatpush1.msra.mxu0 0.0
  %1494 = vmatprep.subr.mxu0 0.0
  %1495 = vmatpush1.msra.mxu0 0.0
  %1496 = vmatprep.subr.mxu0 0.0
  %1497 = vmatpush1.msra.mxu0 0.0
  %1498 = vmatprep.subr.mxu0 0.0
  %1499 = vmatpush1.msra.mxu0 0.0
  %1500 = vmatprep.subr.mxu0 0.0
  %1501 = vmatpush1.msra.mxu0 0.0
  %1502 = vmatprep.subr.mxu0 0.0
  %1503 = vmatpush1.msra.mxu0 0.0
  %1504 = vmatprep.subr.mxu0 0.0
  %1505 = vmatpush1.msra.mxu0 0.0
  %1506 = vmatprep.subr.mxu0 0.0
  %1507 = vmatpush1.msra.mxu0 0.0
  %1508 = vmatprep.subr.mxu0 0.0
  %1509 = vmatpush1.msra.mxu0 0.0
  %1510 = vmatprep.subr.mxu0 0.0
  %1511 = vmatpush1.msra.mxu0 0.0
  %1512 = vmatprep.subr.mxu0 0.0
  %1513 = vmatpush1.msra.mxu0 0.0
  %1514 = vmatprep.subr.mxu0 0.0
  %1515 = vmatpush1.msra.mxu0 0.0
  %1516 = vmatprep.subr.mxu0 0.0
  %1517 = vmatpush1.msra.mxu0 0.0
  %1518 = vmatprep.subr.mxu0 0.0
  %1519 = vmatpush1.msra.mxu0 0.0
  %1520 = vmatprep.subr.mxu0 0.0
  %1521 = vmatpush1.msra.mxu0 0.0
  %1522 = vmatprep.subr.mxu0 0.0
  %1523 = vmatpush1.msra.mxu0 0.0
  %1524 = vmatprep.subr.mxu0 0.0
  %1525 = vmatpush1.msra.mxu0 0.0
  %1526 = vmatprep.subr.mxu0 0.0
  %1527 = vmatpush1.msra.mxu0 0.0
  %1528 = vmatprep.subr.mxu0 0.0
  %1529 = vmatpush1.msra.mxu0 0.0
  %1530 = vmatprep.subr.mxu0 0.0
  %1531 = vmatpush1.msra.mxu0 0.0
  %1532 = vmatprep.mubr.f32.mxu0 0.0
  %1533 = vmatmul.mubr.f32.gmra.mrb[0].mxu0 %v1466
  %v1534 = vpop.f32.mrb[0].mxu0
  %v1535 = vadd.f32 %v1280, %v1534
  %v1536 = vpop.f32.mrb[0].mxu0
  %1537 = vdwg.mxu0
  %1538 = vst.msk [vmem:[%s15] sm:$0xff] %vm53, %v1535
  // Predicated region
  $region62: #{chatglm_model_forward.3} parent=0 // pred_check
    _
  $region63: #{chatglm_model_forward.3} parent=0 // pred_check_branch
    %1540 = sbr.rel (0) target = $region65
  $region64: #{chatglm_model_forward.3} parent=0 // pred_region
    _
  $region65: #{chatglm_model_forward.3} parent=0 // pred_fallthru
    _
  // Predicated region
  $region66: #{chatglm_model_forward.3} parent=0 // pred_check
    _
  $region67: #{chatglm_model_forward.3} parent=0 // pred_check_branch
    %1542 = sbr.rel (0) target = $region69
  $region68: #{chatglm_model_forward.3} parent=0 // pred_region
    _
  $region69: #{chatglm_model_forward.3} parent=0 // pred_fallthru
    _

</llo_original>
